<compile_context>
chip_gen: v5e
topology: v5e:2x2
jax: 0.10.0
libtpu: 0.0.40
codegen_flags: <defaults>
</compile_context>

<pallas_src>
import functools

import jax
import jax.numpy as jnp
from jax.experimental import pallas as pl
from jax.experimental.pallas import tpu as pltpu

# ----------------------------- model config (small) -----------------------------
VOCAB = 100
BATCH = 2
SEQ = 8
HIDDEN = 32
N_HEADS = 2
HEAD_DIM = HIDDEN // N_HEADS
FFN = 64
N_LAYERS = 2
N_CLASSES = 4
LOGITS_PAD = 128          # lane-dense padded logits width (sliced back to 4 outside)
LN_EPS = 1e-5


# ----------------------------- in-kernel helpers --------------------------------
def _layernorm(x, gamma, beta):
    mean = jnp.mean(x, axis=-1, keepdims=True)
    var = jnp.mean((x - mean) ** 2, axis=-1, keepdims=True)
    return (x - mean) * jax.lax.rsqrt(var + LN_EPS) * gamma + beta


# ----------------------------- fused Pallas kernel -------------------------------
def fused_encoder_kernel(
        vlen_ref,                                  # SMEM scalar prefetch: (B,) int32
        x_ref,                                     # (1, S, H) raw embeddings
        embg_ref, embb_ref,                        # embedding LayerNorm
        wqkv_ref, bqkv_ref, wo_ref, bo_ref,        # (L, H, 3H), (L,1,3H), (L,H,H), (L,1,H)
        ln1g_ref, ln1b_ref,                        # post-attention LN
        w1_ref, b1_ref, w2_ref, b2_ref,            # FFN
        ln2g_ref, ln2b_ref,                        # post-FFN LN
        wp_ref, bp_ref,                            # pooler
        wc_ref, bc_ref,                            # classifier (padded to 128 cols)
        out_ref):                                  # (1, 1, 128) padded logits
    b = pl.program_id(0)

    # Embedding LayerNorm.
    x = _layernorm(x_ref[0], embg_ref[...], embb_ref[...])          # (S, H)

    # Rebuild the additive key-padding bias from the per-example valid length.
    # TODO(synk): assumes contiguous (prefix) attention masks as produced by the
    # Longformer tokenizer; arbitrary 0/1 masks would need the full mask tensor.
    vlen = vlen_ref[b]
    col = jax.lax.broadcasted_iota(jnp.int32, (1, SEQ), 1)
    mask_bias = jnp.where(col < vlen, 0.0, -1e9).astype(jnp.float32)  # (1, S)

    for l in range(N_LAYERS):                     # static layer loop (fully unrolled)
        # ---- self-attention (fused QKV; scale pre-folded into Q columns) ----
        qkv = jnp.dot(x, wqkv_ref[l], preferred_element_type=jnp.float32) + bqkv_ref[l]
        q = qkv[:, 0 * HIDDEN:1 * HIDDEN]
        k = qkv[:, 1 * HIDDEN:2 * HIDDEN]
        v = qkv[:, 2 * HIDDEN:3 * HIDDEN]

        # Head-batched formulation: stack heads on a leading axis (no minor-dim
        # reshape), contract with two batched einsums.
        qh = jnp.stack([q[:, h * HEAD_DIM:(h + 1) * HEAD_DIM] for h in range(N_HEADS)], axis=0)
        kh = jnp.stack([k[:, h * HEAD_DIM:(h + 1) * HEAD_DIM] for h in range(N_HEADS)], axis=0)
        vh = jnp.stack([v[:, h * HEAD_DIM:(h + 1) * HEAD_DIM] for h in range(N_HEADS)], axis=0)

        s = jnp.einsum('hqd,hkd->hqk', qh, kh,
                       preferred_element_type=jnp.float32)           # (Hh, S, S)
        s = s + mask_bias[None, :, :]
        s = s - jnp.max(s, axis=-1, keepdims=True)
        p = jnp.exp(s)
        p = p * pl.reciprocal(jnp.sum(p, axis=-1, keepdims=True), approx=True)
        ctx = jnp.einsum('hqk,hkd->hqd', p, vh,
                         preferred_element_type=jnp.float32)         # (Hh, S, Dh)

        # Output projection split by head rows -> no concatenate needed.
        wo = wo_ref[l]                                               # (H, H)
        attn_out = bo_ref[l]                                         # (1, H), broadcasts
        for h in range(N_HEADS):
            attn_out = attn_out + jnp.dot(
                ctx[h], wo[h * HEAD_DIM:(h + 1) * HEAD_DIM, :],
                preferred_element_type=jnp.float32)
        x = _layernorm(x + attn_out, ln1g_ref[l], ln1b_ref[l])

        # ---- feed-forward ----
        h1 = jnp.dot(x, w1_ref[l], preferred_element_type=jnp.float32) + b1_ref[l]
        # TODO(synk): HF Longformer uses exact (erf) GELU; tanh approximation kept here
        # to avoid relying on erf lowering in Mosaic (encoder weights are synthetic anyway).
        h1 = jax.nn.gelu(h1)
        ff = jnp.dot(h1, w2_ref[l], preferred_element_type=jnp.float32) + b2_ref[l]
        x = _layernorm(x + ff, ln2g_ref[l], ln2b_ref[l])

    # ---- pooler ([CLS]) + Dropout(identity) + classifier, fused in the same kernel ----
    cls = x[0:1, :]                                                  # (1, H)
    pooled = jnp.tanh(
        jnp.dot(cls, wp_ref[...], preferred_element_type=jnp.float32) + bp_ref[...])
    out_ref[0] = jnp.dot(pooled, wc_ref[...],
                         preferred_element_type=jnp.float32) + bc_ref[...]   # (1, 128)


# ----------------------------- pallas_call wrapper -------------------------------
def _rep(shape):
    """Full-array block replicated across the batch grid (fetched once)."""
    zeros = (0,) * len(shape)
    return pl.BlockSpec(shape, lambda b, vl, z=zeros: z)


def fused_forward(x_emb, valid_len, p):
    B, S, H = x_emb.shape
    L, F = N_LAYERS, FFN
    logits_pad = pl.pallas_call(
        fused_encoder_kernel,
        out_shape=jax.ShapeDtypeStruct((B, 1, LOGITS_PAD), jnp.float32),
        grid_spec=pltpu.PrefetchScalarGridSpec(
            num_scalar_prefetch=1,
            grid=(B,),
            in_specs=[
                pl.BlockSpec((1, S, H), lambda b, vl: (b, 0, 0)),
                _rep((1, H)), _rep((1, H)),
                _rep((L, H, 3 * H)), _rep((L, 1, 3 * H)),
                _rep((L, H, H)), _rep((L, 1, H)),
                _rep((L, 1, H)), _rep((L, 1, H)),
                _rep((L, H, F)), _rep((L, 1, F)),
                _rep((L, F, H)), _rep((L, 1, H)),
                _rep((L, 1, H)), _rep((L, 1, H)),
                _rep((H, H)), _rep((1, H)),
                _rep((H, LOGITS_PAD)), _rep((1, LOGITS_PAD)),
            ],
            out_specs=pl.BlockSpec((1, 1, LOGITS_PAD), lambda b, vl: (b, 0, 0)),
        ),
        compiler_params=pltpu.CompilerParams(dimension_semantics=("parallel",)),
    )(valid_len, x_emb,
      p["emb_ln_g"], p["emb_ln_b"],
      p["wqkv"], p["bqkv"], p["wo"], p["bo"], p["ln1_g"], p["ln1_b"],
      p["w1"], p["b1"], p["w2"], p["b2"], p["ln2_g"], p["ln2_b"],
      p["wp"], p["bp"], p["wc_pad"], p["bc_pad"])
    return logits_pad[:, 0, :N_CLASSES]


# ----------------------------- parameter init ------------------------------------
def init_params(key):
    def nrm(k, shape, scale=0.02):
        return (scale * jax.random.normal(k, shape)).astype(jnp.float32)

    keys = iter(jax.random.split(key, 16))
    scale = 1.0 / (HEAD_DIM ** 0.5)

    wqkv = nrm(next(keys), (N_LAYERS, HIDDEN, 3 * HIDDEN))
    # Fold the 1/sqrt(head_dim) attention scale into the Q projection (outside kernel).
    wqkv = wqkv.at[:, :, :HIDDEN].multiply(scale)

    wc = nrm(next(keys), (HIDDEN, N_CLASSES))
    wc_pad = jnp.zeros((HIDDEN, LOGITS_PAD), jnp.float32).at[:, :N_CLASSES].set(wc)

    return {
        "word_emb": nrm(next(keys), (VOCAB, HIDDEN)),
        "pos_emb": nrm(next(keys), (SEQ, HIDDEN)),
        "emb_ln_g": jnp.ones((1, HIDDEN), jnp.float32),
        "emb_ln_b": jnp.zeros((1, HIDDEN), jnp.float32),
        "wqkv": wqkv,
        "bqkv": jnp.zeros((N_LAYERS, 1, 3 * HIDDEN), jnp.float32),
        "wo": nrm(next(keys), (N_LAYERS, HIDDEN, HIDDEN)),
        "bo": jnp.zeros((N_LAYERS, 1, HIDDEN), jnp.float32),
        "ln1_g": jnp.ones((N_LAYERS, 1, HIDDEN), jnp.float32),
        "ln1_b": jnp.zeros((N_LAYERS, 1, HIDDEN), jnp.float32),
        "w1": nrm(next(keys), (N_LAYERS, HIDDEN, FFN)),
        "b1": jnp.zeros((N_LAYERS, 1, FFN), jnp.float32),
        "w2": nrm(next(keys), (N_LAYERS, FFN, HIDDEN)),
        "b2": jnp.zeros((N_LAYERS, 1, HIDDEN), jnp.float32),
        "ln2_g": jnp.ones((N_LAYERS, 1, HIDDEN), jnp.float32),
        "ln2_b": jnp.zeros((N_LAYERS, 1, HIDDEN), jnp.float32),
        "wp": nrm(next(keys), (HIDDEN, HIDDEN)),
        "bp": jnp.zeros((1, HIDDEN), jnp.float32),
        "wc_pad": wc_pad,
        "bc_pad": jnp.zeros((1, LOGITS_PAD), jnp.float32),
    }


# ----------------------------- forward pass ---------------------------------------
@jax.jit
def model_forward(params, input_ids, attention_mask):
    # Embedding gather + positional embeddings stay in plain JAX (glue); everything
    # else (emb LN, encoder layers, pooler, classifier) runs in one Pallas kernel.
    x = params["word_emb"][input_ids] + params["pos_emb"][None, :, :]
    x = x.astype(jnp.float32)

    # Per-example valid length for the (prefix) key-padding mask, prefetched into SMEM.
    valid_len = jnp.sum(attention_mask.astype(jnp.int32), axis=-1).astype(jnp.int32)

    # TODO(synk): Longformer's sliding-window + global attention is replaced by dense
    # masked attention (equivalent at these tiny sequence lengths).
    return fused_forward(x, valid_len, params)      # Dropout -> identity; Linear(H, 4)


# ----------------------------- main ------------------------------------------------
if __name__ == "__main__":
    key = jax.random.PRNGKey(0)
    pkey, ikey = jax.random.split(key)
    params = init_params(pkey)

    input_ids = jax.random.randint(ikey, (BATCH, SEQ), 0, VOCAB, dtype=jnp.int32)
    attention_mask = jnp.ones((BATCH, SEQ), jnp.int32)
    attention_mask = attention_mask.at[1, SEQ - 2:].set(0)   # some padding in sample 1

    logits = model_forward(params, input_ids, attention_mask)
    jax.block_until_ready(logits)
    assert logits.shape == (BATCH, N_CLASSES)
    print("KERNEL_OK")
</pallas_src>

<mosaic_0001>
module attributes {stable_mosaic.version = 11 : i64} {
  func.func @fused_encoder_kernel(%arg0: i32, %arg1: memref<2xi32, #tpu.memory_space<smem>>, %arg2: memref<1x8x32xf32, #tpu.memory_space<vmem>>, %arg3: memref<1x32xf32, #tpu.memory_space<vmem>>, %arg4: memref<1x32xf32, #tpu.memory_space<vmem>>, %arg5: memref<2x32x96xf32, #tpu.memory_space<vmem>>, %arg6: memref<2x1x96xf32, #tpu.memory_space<vmem>>, %arg7: memref<2x32x32xf32, #tpu.memory_space<vmem>>, %arg8: memref<2x1x32xf32, #tpu.memory_space<vmem>>, %arg9: memref<2x1x32xf32, #tpu.memory_space<vmem>>, %arg10: memref<2x1x32xf32, #tpu.memory_space<vmem>>, %arg11: memref<2x32x64xf32, #tpu.memory_space<vmem>>, %arg12: memref<2x1x64xf32, #tpu.memory_space<vmem>>, %arg13: memref<2x64x32xf32, #tpu.memory_space<vmem>>, %arg14: memref<2x1x32xf32, #tpu.memory_space<vmem>>, %arg15: memref<2x1x32xf32, #tpu.memory_space<vmem>>, %arg16: memref<2x1x32xf32, #tpu.memory_space<vmem>>, %arg17: memref<32x32xf32, #tpu.memory_space<vmem>>, %arg18: memref<1x32xf32, #tpu.memory_space<vmem>>, %arg19: memref<32x128xf32, #tpu.memory_space<vmem>>, %arg20: memref<1x128xf32, #tpu.memory_space<vmem>>, %arg21: memref<1x1x128xf32, #tpu.memory_space<vmem>>) attributes {dimension_semantics = [#tpu.dimension_semantics<parallel>], iteration_bounds = array<i64: 2>, scalar_prefetch = 1 : i64, scratch_operands = 0 : i64, tpu.core_type = #tpu.core_type<tc>, window_params = [{transform_indices = @transform_0, window_bounds = array<i64: 1, 8, 32>}, {pipeline_mode = #tpu.pipeline_mode<synchronous>, transform_indices = @transform_1, window_bounds = array<i64: 1, 32>}, {pipeline_mode = #tpu.pipeline_mode<synchronous>, transform_indices = @transform_2, window_bounds = array<i64: 1, 32>}, {pipeline_mode = #tpu.pipeline_mode<synchronous>, transform_indices = @transform_3, window_bounds = array<i64: 2, 32, 96>}, {pipeline_mode = #tpu.pipeline_mode<synchronous>, transform_indices = @transform_4, window_bounds = array<i64: 2, 1, 96>}, {pipeline_mode = #tpu.pipeline_mode<synchronous>, transform_indices = @transform_5, window_bounds = array<i64: 2, 32, 32>}, {pipeline_mode = #tpu.pipeline_mode<synchronous>, transform_indices = @transform_6, window_bounds = array<i64: 2, 1, 32>}, {pipeline_mode = #tpu.pipeline_mode<synchronous>, transform_indices = @transform_7, window_bounds = array<i64: 2, 1, 32>}, {pipeline_mode = #tpu.pipeline_mode<synchronous>, transform_indices = @transform_8, window_bounds = array<i64: 2, 1, 32>}, {pipeline_mode = #tpu.pipeline_mode<synchronous>, transform_indices = @transform_9, window_bounds = array<i64: 2, 32, 64>}, {pipeline_mode = #tpu.pipeline_mode<synchronous>, transform_indices = @transform_10, window_bounds = array<i64: 2, 1, 64>}, {pipeline_mode = #tpu.pipeline_mode<synchronous>, transform_indices = @transform_11, window_bounds = array<i64: 2, 64, 32>}, {pipeline_mode = #tpu.pipeline_mode<synchronous>, transform_indices = @transform_12, window_bounds = array<i64: 2, 1, 32>}, {pipeline_mode = #tpu.pipeline_mode<synchronous>, transform_indices = @transform_13, window_bounds = array<i64: 2, 1, 32>}, {pipeline_mode = #tpu.pipeline_mode<synchronous>, transform_indices = @transform_14, window_bounds = array<i64: 2, 1, 32>}, {pipeline_mode = #tpu.pipeline_mode<synchronous>, transform_indices = @transform_15, window_bounds = array<i64: 32, 32>}, {pipeline_mode = #tpu.pipeline_mode<synchronous>, transform_indices = @transform_16, window_bounds = array<i64: 1, 32>}, {pipeline_mode = #tpu.pipeline_mode<synchronous>, transform_indices = @transform_17, window_bounds = array<i64: 32, 128>}, {pipeline_mode = #tpu.pipeline_mode<synchronous>, transform_indices = @transform_18, window_bounds = array<i64: 1, 128>}, {transform_indices = @transform_19, window_bounds = array<i64: 1, 1, 128>}]} {
    %c0 = arith.constant 0 : index
    %c0_0 = arith.constant 0 : index
    %c0_1 = arith.constant 0 : index
    %0 = vector.load %arg2[%c0, %c0_0, %c0_1] : memref<1x8x32xf32, #tpu.memory_space<vmem>>, vector<1x8x32xf32>
    %1 = vector.shape_cast %0 : vector<1x8x32xf32> to vector<8x32xf32>
    %c0_2 = arith.constant 0 : index
    %c0_3 = arith.constant 0 : index
    %2 = vector.load %arg3[%c0_2, %c0_3] : memref<1x32xf32, #tpu.memory_space<vmem>>, vector<1x32xf32>
    %c0_4 = arith.constant 0 : index
    %c0_5 = arith.constant 0 : index
    %3 = vector.load %arg4[%c0_4, %c0_5] : memref<1x32xf32, #tpu.memory_space<vmem>>, vector<1x32xf32>
    %cst = arith.constant dense<0.000000e+00> : vector<8xf32>
    %4 = vector.multi_reduction <add>, %1, %cst [1] : vector<8x32xf32> to vector<8xf32>
    %5 = vector.shape_cast %4 : vector<8xf32> to vector<8x1xf32>
    %cst_6 = arith.constant 3.200000e+01 : f32
    %6 = vector.broadcast %cst_6 : f32 to vector<8x1xf32>
    %7 = arith.divf %5, %6 : vector<8x1xf32>
    %8 = vector.broadcast %7 : vector<8x1xf32> to vector<8x32xf32>
    %9 = arith.subf %1, %8 : vector<8x32xf32>
    %10 = arith.mulf %9, %9 : vector<8x32xf32>
    %cst_7 = arith.constant dense<0.000000e+00> : vector<8xf32>
    %11 = vector.multi_reduction <add>, %10, %cst_7 [1] : vector<8x32xf32> to vector<8xf32>
    %12 = vector.shape_cast %11 : vector<8xf32> to vector<8x1xf32>
    %cst_8 = arith.constant 3.200000e+01 : f32
    %13 = vector.broadcast %cst_8 : f32 to vector<8x1xf32>
    %14 = arith.divf %12, %13 : vector<8x1xf32>
    %15 = vector.broadcast %7 : vector<8x1xf32> to vector<8x32xf32>
    %16 = arith.subf %1, %15 : vector<8x32xf32>
    %cst_9 = arith.constant 9.99999974E-6 : f32
    %17 = vector.broadcast %cst_9 : f32 to vector<8x1xf32>
    %18 = arith.addf %14, %17 : vector<8x1xf32>
    %19 = math.rsqrt %18 : vector<8x1xf32>
    %20 = vector.broadcast %19 : vector<8x1xf32> to vector<8x32xf32>
    %21 = arith.mulf %16, %20 : vector<8x32xf32>
    %22 = vector.broadcast %2 : vector<1x32xf32> to vector<8x32xf32>
    %23 = arith.mulf %21, %22 : vector<8x32xf32>
    %24 = vector.broadcast %3 : vector<1x32xf32> to vector<8x32xf32>
    %25 = arith.addf %23, %24 : vector<8x32xf32>
    %26 = arith.index_cast %arg0 : i32 to index
    %27 = memref.load %arg1[%26] : memref<2xi32, #tpu.memory_space<smem>>
    %28 = tpu.iota {dimensions = array<i32: 1>} : vector<1x8xi32>
    %29 = vector.broadcast %27 : i32 to vector<1x8xi32>
    %30 = arith.cmpi slt, %28, %29 : vector<1x8xi32>
    %cst_10 = arith.constant 0.000000e+00 : f32
    %cst_11 = arith.constant -1.000000e+09 : f32
    %31 = vector.broadcast %cst_10 : f32 to vector<1x8xf32>
    %32 = vector.broadcast %cst_11 : f32 to vector<1x8xf32>
    %33 = arith.select %30, %31, %32 : vector<1x8xi1>, vector<1x8xf32>
    %c0_12 = arith.constant 0 : index
    %c0_13 = arith.constant 0 : index
    %c0_14 = arith.constant 0 : index
    %34 = vector.load %arg5[%c0_12, %c0_13, %c0_14] : memref<2x32x96xf32, #tpu.memory_space<vmem>>, vector<1x32x96xf32>
    %35 = vector.shape_cast %34 : vector<1x32x96xf32> to vector<32x96xf32>
    %cst_15 = arith.constant dense<0.000000e+00> : vector<8x96xf32>
    %36 = tpu.matmul %25, %35, %cst_15 {dimension_numbers = #tpu.dot_dimension_numbers<[1], [0], [0], [1], [0, 0, 1, 1], [], []>} : vector<8x32xf32>, vector<32x96xf32>, vector<8x96xf32> -> vector<8x96xf32>
    %c0_16 = arith.constant 0 : index
    %c0_17 = arith.constant 0 : index
    %c0_18 = arith.constant 0 : index
    %37 = vector.load %arg6[%c0_16, %c0_17, %c0_18] : memref<2x1x96xf32, #tpu.memory_space<vmem>>, vector<1x1x96xf32>
    %38 = vector.shape_cast %37 : vector<1x1x96xf32> to vector<1x96xf32>
    %39 = vector.broadcast %38 : vector<1x96xf32> to vector<8x96xf32>
    %40 = arith.addf %36, %39 : vector<8x96xf32>
    %41 = vector.extract_strided_slice %40 {offsets = [0, 0], sizes = [8, 32], strides = [1, 1]} : vector<8x96xf32> to vector<8x32xf32>
    %42 = vector.extract_strided_slice %40 {offsets = [0, 32], sizes = [8, 32], strides = [1, 1]} : vector<8x96xf32> to vector<8x32xf32>
    %43 = vector.extract_strided_slice %40 {offsets = [0, 64], sizes = [8, 32], strides = [1, 1]} : vector<8x96xf32> to vector<8x32xf32>
    %44 = vector.extract_strided_slice %41 {offsets = [0, 0], sizes = [8, 16], strides = [1, 1]} : vector<8x32xf32> to vector<8x16xf32>
    %45 = vector.extract_strided_slice %41 {offsets = [0, 16], sizes = [8, 16], strides = [1, 1]} : vector<8x32xf32> to vector<8x16xf32>
    %46 = vector.shape_cast %44 : vector<8x16xf32> to vector<1x8x16xf32>
    %47 = vector.shape_cast %45 : vector<8x16xf32> to vector<1x8x16xf32>
    %48 = tpu.concatenate %46, %47 in 0 : vector<1x8x16xf32>, vector<1x8x16xf32> -> vector<2x8x16xf32>
    %49 = vector.extract_strided_slice %42 {offsets = [0, 0], sizes = [8, 16], strides = [1, 1]} : vector<8x32xf32> to vector<8x16xf32>
    %50 = vector.extract_strided_slice %42 {offsets = [0, 16], sizes = [8, 16], strides = [1, 1]} : vector<8x32xf32> to vector<8x16xf32>
    %51 = vector.shape_cast %49 : vector<8x16xf32> to vector<1x8x16xf32>
    %52 = vector.shape_cast %50 : vector<8x16xf32> to vector<1x8x16xf32>
    %53 = tpu.concatenate %51, %52 in 0 : vector<1x8x16xf32>, vector<1x8x16xf32> -> vector<2x8x16xf32>
    %54 = vector.extract_strided_slice %43 {offsets = [0, 0], sizes = [8, 16], strides = [1, 1]} : vector<8x32xf32> to vector<8x16xf32>
    %55 = vector.extract_strided_slice %43 {offsets = [0, 16], sizes = [8, 16], strides = [1, 1]} : vector<8x32xf32> to vector<8x16xf32>
    %56 = vector.shape_cast %54 : vector<8x16xf32> to vector<1x8x16xf32>
    %57 = vector.shape_cast %55 : vector<8x16xf32> to vector<1x8x16xf32>
    %58 = tpu.concatenate %56, %57 in 0 : vector<1x8x16xf32>, vector<1x8x16xf32> -> vector<2x8x16xf32>
    "tpu.trace_start"() <{level = 10 : i32, message = "hqd,hkd->hqk"}> : () -> ()
    %cst_19 = arith.constant dense<0.000000e+00> : vector<2x8x8xf32>
    %59 = tpu.matmul %48, %53, %cst_19 {dimension_numbers = #tpu.dot_dimension_numbers<[2], [2], [1], [1], [0, 0, 0, 1, 1, 1], [0], [0]>} : vector<2x8x16xf32>, vector<2x8x16xf32>, vector<2x8x8xf32> -> vector<2x8x8xf32>
    "tpu.trace_stop"() : () -> ()
    %60 = vector.shape_cast %33 : vector<1x8xf32> to vector<1x1x8xf32>
    %61 = vector.broadcast %60 : vector<1x1x8xf32> to vector<2x8x8xf32>
    %62 = arith.addf %59, %61 : vector<2x8x8xf32>
    %cst_20 = arith.constant dense<0xFF800000> : vector<2x8xf32>
    %63 = vector.multi_reduction <maximumf>, %62, %cst_20 [2] : vector<2x8x8xf32> to vector<2x8xf32>
    %64 = vector.shape_cast %63 : vector<2x8xf32> to vector<2x8x1xf32>
    %65 = vector.broadcast %64 : vector<2x8x1xf32> to vector<2x8x8xf32>
    %66 = arith.subf %62, %65 : vector<2x8x8xf32>
    %67 = math.exp %66 : vector<2x8x8xf32>
    %cst_21 = arith.constant dense<0.000000e+00> : vector<2x8xf32>
    %68 = vector.multi_reduction <add>, %67, %cst_21 [2] : vector<2x8x8xf32> to vector<2x8xf32>
    %69 = vector.shape_cast %68 : vector<2x8xf32> to vector<2x8x1xf32>
    %70 = tpu.reciprocal %69 {approx = true} : vector<2x8x1xf32> -> vector<2x8x1xf32>
    %71 = vector.broadcast %70 : vector<2x8x1xf32> to vector<2x8x8xf32>
    %72 = arith.mulf %67, %71 : vector<2x8x8xf32>
    "tpu.trace_start"() <{level = 10 : i32, message = "hqk,hkd->hqd"}> : () -> ()
    %cst_22 = arith.constant dense<0.000000e+00> : vector<2x8x16xf32>
    %73 = tpu.matmul %72, %58, %cst_22 {dimension_numbers = #tpu.dot_dimension_numbers<[2], [1], [1], [2], [0, 0, 0, 1, 1, 2], [0], [0]>} : vector<2x8x8xf32>, vector<2x8x16xf32>, vector<2x8x16xf32> -> vector<2x8x16xf32>
    "tpu.trace_stop"() : () -> ()
    %c0_23 = arith.constant 0 : index
    %c0_24 = arith.constant 0 : index
    %c0_25 = arith.constant 0 : index
    %74 = vector.load %arg7[%c0_23, %c0_24, %c0_25] : memref<2x32x32xf32, #tpu.memory_space<vmem>>, vector<1x32x32xf32>
    %75 = vector.shape_cast %74 : vector<1x32x32xf32> to vector<32x32xf32>
    %c0_26 = arith.constant 0 : index
    %c0_27 = arith.constant 0 : index
    %c0_28 = arith.constant 0 : index
    %76 = vector.load %arg8[%c0_26, %c0_27, %c0_28] : memref<2x1x32xf32, #tpu.memory_space<vmem>>, vector<1x1x32xf32>
    %77 = vector.shape_cast %76 : vector<1x1x32xf32> to vector<1x32xf32>
    %78 = vector.extract_strided_slice %73 {offsets = [0, 0, 0], sizes = [1, 8, 16], strides = [1, 1, 1]} : vector<2x8x16xf32> to vector<1x8x16xf32>
    %79 = vector.shape_cast %78 : vector<1x8x16xf32> to vector<8x16xf32>
    %80 = vector.extract_strided_slice %75 {offsets = [0, 0], sizes = [16, 32], strides = [1, 1]} : vector<32x32xf32> to vector<16x32xf32>
    %cst_29 = arith.constant dense<0.000000e+00> : vector<8x32xf32>
    %81 = tpu.matmul %79, %80, %cst_29 {dimension_numbers = #tpu.dot_dimension_numbers<[1], [0], [0], [1], [0, 0, 1, 1], [], []>} : vector<8x16xf32>, vector<16x32xf32>, vector<8x32xf32> -> vector<8x32xf32>
    %82 = vector.broadcast %77 : vector<1x32xf32> to vector<8x32xf32>
    %83 = arith.addf %82, %81 : vector<8x32xf32>
    %84 = vector.extract_strided_slice %73 {offsets = [1, 0, 0], sizes = [1, 8, 16], strides = [1, 1, 1]} : vector<2x8x16xf32> to vector<1x8x16xf32>
    %85 = vector.shape_cast %84 : vector<1x8x16xf32> to vector<8x16xf32>
    %86 = vector.extract_strided_slice %75 {offsets = [16, 0], sizes = [16, 32], strides = [1, 1]} : vector<32x32xf32> to vector<16x32xf32>
    %cst_30 = arith.constant dense<0.000000e+00> : vector<8x32xf32>
    %87 = tpu.matmul %85, %86, %cst_30 {dimension_numbers = #tpu.dot_dimension_numbers<[1], [0], [0], [1], [0, 0, 1, 1], [], []>} : vector<8x16xf32>, vector<16x32xf32>, vector<8x32xf32> -> vector<8x32xf32>
    %88 = arith.addf %83, %87 : vector<8x32xf32>
    %89 = arith.addf %25, %88 : vector<8x32xf32>
    %c0_31 = arith.constant 0 : index
    %c0_32 = arith.constant 0 : index
    %c0_33 = arith.constant 0 : index
    %90 = vector.load %arg9[%c0_31, %c0_32, %c0_33] : memref<2x1x32xf32, #tpu.memory_space<vmem>>, vector<1x1x32xf32>
    %91 = vector.shape_cast %90 : vector<1x1x32xf32> to vector<1x32xf32>
    %c0_34 = arith.constant 0 : index
    %c0_35 = arith.constant 0 : index
    %c0_36 = arith.constant 0 : index
    %92 = vector.load %arg10[%c0_34, %c0_35, %c0_36] : memref<2x1x32xf32, #tpu.memory_space<vmem>>, vector<1x1x32xf32>
    %93 = vector.shape_cast %92 : vector<1x1x32xf32> to vector<1x32xf32>
    %cst_37 = arith.constant dense<0.000000e+00> : vector<8xf32>
    %94 = vector.multi_reduction <add>, %89, %cst_37 [1] : vector<8x32xf32> to vector<8xf32>
    %95 = vector.shape_cast %94 : vector<8xf32> to vector<8x1xf32>
    %cst_38 = arith.constant 3.200000e+01 : f32
    %96 = vector.broadcast %cst_38 : f32 to vector<8x1xf32>
    %97 = arith.divf %95, %96 : vector<8x1xf32>
    %98 = vector.broadcast %97 : vector<8x1xf32> to vector<8x32xf32>
    %99 = arith.subf %89, %98 : vector<8x32xf32>
    %100 = arith.mulf %99, %99 : vector<8x32xf32>
    %cst_39 = arith.constant dense<0.000000e+00> : vector<8xf32>
    %101 = vector.multi_reduction <add>, %100, %cst_39 [1] : vector<8x32xf32> to vector<8xf32>
    %102 = vector.shape_cast %101 : vector<8xf32> to vector<8x1xf32>
    %cst_40 = arith.constant 3.200000e+01 : f32
    %103 = vector.broadcast %cst_40 : f32 to vector<8x1xf32>
    %104 = arith.divf %102, %103 : vector<8x1xf32>
    %105 = vector.broadcast %97 : vector<8x1xf32> to vector<8x32xf32>
    %106 = arith.subf %89, %105 : vector<8x32xf32>
    %cst_41 = arith.constant 9.99999974E-6 : f32
    %107 = vector.broadcast %cst_41 : f32 to vector<8x1xf32>
    %108 = arith.addf %104, %107 : vector<8x1xf32>
    %109 = math.rsqrt %108 : vector<8x1xf32>
    %110 = vector.broadcast %109 : vector<8x1xf32> to vector<8x32xf32>
    %111 = arith.mulf %106, %110 : vector<8x32xf32>
    %112 = vector.broadcast %91 : vector<1x32xf32> to vector<8x32xf32>
    %113 = arith.mulf %111, %112 : vector<8x32xf32>
    %114 = vector.broadcast %93 : vector<1x32xf32> to vector<8x32xf32>
    %115 = arith.addf %113, %114 : vector<8x32xf32>
    %c0_42 = arith.constant 0 : index
    %c0_43 = arith.constant 0 : index
    %c0_44 = arith.constant 0 : index
    %116 = vector.load %arg11[%c0_42, %c0_43, %c0_44] : memref<2x32x64xf32, #tpu.memory_space<vmem>>, vector<1x32x64xf32>
    %117 = vector.shape_cast %116 : vector<1x32x64xf32> to vector<32x64xf32>
    %cst_45 = arith.constant dense<0.000000e+00> : vector<8x64xf32>
    %118 = tpu.matmul %115, %117, %cst_45 {dimension_numbers = #tpu.dot_dimension_numbers<[1], [0], [0], [1], [0, 0, 1, 1], [], []>} : vector<8x32xf32>, vector<32x64xf32>, vector<8x64xf32> -> vector<8x64xf32>
    %c0_46 = arith.constant 0 : index
    %c0_47 = arith.constant 0 : index
    %c0_48 = arith.constant 0 : index
    %119 = vector.load %arg12[%c0_46, %c0_47, %c0_48] : memref<2x1x64xf32, #tpu.memory_space<vmem>>, vector<1x1x64xf32>
    %120 = vector.shape_cast %119 : vector<1x1x64xf32> to vector<1x64xf32>
    %121 = vector.broadcast %120 : vector<1x64xf32> to vector<8x64xf32>
    %122 = arith.addf %118, %121 : vector<8x64xf32>
    %123 = arith.mulf %122, %122 : vector<8x64xf32>
    %124 = arith.mulf %122, %123 : vector<8x64xf32>
    %cst_49 = arith.constant 4.471500e-02 : f32
    %125 = vector.broadcast %cst_49 : f32 to vector<8x64xf32>
    %126 = arith.mulf %125, %124 : vector<8x64xf32>
    %127 = arith.addf %122, %126 : vector<8x64xf32>
    %cst_50 = arith.constant 0.797884583 : f32
    %128 = vector.broadcast %cst_50 : f32 to vector<8x64xf32>
    %129 = arith.mulf %128, %127 : vector<8x64xf32>
    %130 = math.tanh %129 : vector<8x64xf32>
    %cst_51 = arith.constant 1.000000e+00 : f32
    %131 = vector.broadcast %cst_51 : f32 to vector<8x64xf32>
    %132 = arith.addf %131, %130 : vector<8x64xf32>
    %cst_52 = arith.constant 5.000000e-01 : f32
    %133 = vector.broadcast %cst_52 : f32 to vector<8x64xf32>
    %134 = arith.mulf %133, %132 : vector<8x64xf32>
    %135 = arith.mulf %122, %134 : vector<8x64xf32>
    %c0_53 = arith.constant 0 : index
    %c0_54 = arith.constant 0 : index
    %c0_55 = arith.constant 0 : index
    %136 = vector.load %arg13[%c0_53, %c0_54, %c0_55] : memref<2x64x32xf32, #tpu.memory_space<vmem>>, vector<1x64x32xf32>
    %137 = vector.shape_cast %136 : vector<1x64x32xf32> to vector<64x32xf32>
    %cst_56 = arith.constant dense<0.000000e+00> : vector<8x32xf32>
    %138 = tpu.matmul %135, %137, %cst_56 {dimension_numbers = #tpu.dot_dimension_numbers<[1], [0], [0], [1], [0, 0, 1, 1], [], []>} : vector<8x64xf32>, vector<64x32xf32>, vector<8x32xf32> -> vector<8x32xf32>
    %c0_57 = arith.constant 0 : index
    %c0_58 = arith.constant 0 : index
    %c0_59 = arith.constant 0 : index
    %139 = vector.load %arg14[%c0_57, %c0_58, %c0_59] : memref<2x1x32xf32, #tpu.memory_space<vmem>>, vector<1x1x32xf32>
    %140 = vector.shape_cast %139 : vector<1x1x32xf32> to vector<1x32xf32>
    %141 = vector.broadcast %140 : vector<1x32xf32> to vector<8x32xf32>
    %142 = arith.addf %138, %141 : vector<8x32xf32>
    %143 = arith.addf %115, %142 : vector<8x32xf32>
    %c0_60 = arith.constant 0 : index
    %c0_61 = arith.constant 0 : index
    %c0_62 = arith.constant 0 : index
    %144 = vector.load %arg15[%c0_60, %c0_61, %c0_62] : memref<2x1x32xf32, #tpu.memory_space<vmem>>, vector<1x1x32xf32>
    %145 = vector.shape_cast %144 : vector<1x1x32xf32> to vector<1x32xf32>
    %c0_63 = arith.constant 0 : index
    %c0_64 = arith.constant 0 : index
    %c0_65 = arith.constant 0 : index
    %146 = vector.load %arg16[%c0_63, %c0_64, %c0_65] : memref<2x1x32xf32, #tpu.memory_space<vmem>>, vector<1x1x32xf32>
    %147 = vector.shape_cast %146 : vector<1x1x32xf32> to vector<1x32xf32>
    %cst_66 = arith.constant dense<0.000000e+00> : vector<8xf32>
    %148 = vector.multi_reduction <add>, %143, %cst_66 [1] : vector<8x32xf32> to vector<8xf32>
    %149 = vector.shape_cast %148 : vector<8xf32> to vector<8x1xf32>
    %cst_67 = arith.constant 3.200000e+01 : f32
    %150 = vector.broadcast %cst_67 : f32 to vector<8x1xf32>
    %151 = arith.divf %149, %150 : vector<8x1xf32>
    %152 = vector.broadcast %151 : vector<8x1xf32> to vector<8x32xf32>
    %153 = arith.subf %143, %152 : vector<8x32xf32>
    %154 = arith.mulf %153, %153 : vector<8x32xf32>
    %cst_68 = arith.constant dense<0.000000e+00> : vector<8xf32>
    %155 = vector.multi_reduction <add>, %154, %cst_68 [1] : vector<8x32xf32> to vector<8xf32>
    %156 = vector.shape_cast %155 : vector<8xf32> to vector<8x1xf32>
    %cst_69 = arith.constant 3.200000e+01 : f32
    %157 = vector.broadcast %cst_69 : f32 to vector<8x1xf32>
    %158 = arith.divf %156, %157 : vector<8x1xf32>
    %159 = vector.broadcast %151 : vector<8x1xf32> to vector<8x32xf32>
    %160 = arith.subf %143, %159 : vector<8x32xf32>
    %cst_70 = arith.constant 9.99999974E-6 : f32
    %161 = vector.broadcast %cst_70 : f32 to vector<8x1xf32>
    %162 = arith.addf %158, %161 : vector<8x1xf32>
    %163 = math.rsqrt %162 : vector<8x1xf32>
    %164 = vector.broadcast %163 : vector<8x1xf32> to vector<8x32xf32>
    %165 = arith.mulf %160, %164 : vector<8x32xf32>
    %166 = vector.broadcast %145 : vector<1x32xf32> to vector<8x32xf32>
    %167 = arith.mulf %165, %166 : vector<8x32xf32>
    %168 = vector.broadcast %147 : vector<1x32xf32> to vector<8x32xf32>
    %169 = arith.addf %167, %168 : vector<8x32xf32>
    %c1 = arith.constant 1 : index
    %c0_71 = arith.constant 0 : index
    %c0_72 = arith.constant 0 : index
    %170 = vector.load %arg5[%c1, %c0_71, %c0_72] : memref<2x32x96xf32, #tpu.memory_space<vmem>>, vector<1x32x96xf32>
    %171 = vector.shape_cast %170 : vector<1x32x96xf32> to vector<32x96xf32>
    %cst_73 = arith.constant dense<0.000000e+00> : vector<8x96xf32>
    %172 = tpu.matmul %169, %171, %cst_73 {dimension_numbers = #tpu.dot_dimension_numbers<[1], [0], [0], [1], [0, 0, 1, 1], [], []>} : vector<8x32xf32>, vector<32x96xf32>, vector<8x96xf32> -> vector<8x96xf32>
    %c1_74 = arith.constant 1 : index
    %c0_75 = arith.constant 0 : index
    %c0_76 = arith.constant 0 : index
    %173 = vector.load %arg6[%c1_74, %c0_75, %c0_76] : memref<2x1x96xf32, #tpu.memory_space<vmem>>, vector<1x1x96xf32>
    %174 = vector.shape_cast %173 : vector<1x1x96xf32> to vector<1x96xf32>
    %175 = vector.broadcast %174 : vector<1x96xf32> to vector<8x96xf32>
    %176 = arith.addf %172, %175 : vector<8x96xf32>
    %177 = vector.extract_strided_slice %176 {offsets = [0, 0], sizes = [8, 32], strides = [1, 1]} : vector<8x96xf32> to vector<8x32xf32>
    %178 = vector.extract_strided_slice %176 {offsets = [0, 32], sizes = [8, 32], strides = [1, 1]} : vector<8x96xf32> to vector<8x32xf32>
    %179 = vector.extract_strided_slice %176 {offsets = [0, 64], sizes = [8, 32], strides = [1, 1]} : vector<8x96xf32> to vector<8x32xf32>
    %180 = vector.extract_strided_slice %177 {offsets = [0, 0], sizes = [8, 16], strides = [1, 1]} : vector<8x32xf32> to vector<8x16xf32>
    %181 = vector.extract_strided_slice %177 {offsets = [0, 16], sizes = [8, 16], strides = [1, 1]} : vector<8x32xf32> to vector<8x16xf32>
    %182 = vector.shape_cast %180 : vector<8x16xf32> to vector<1x8x16xf32>
    %183 = vector.shape_cast %181 : vector<8x16xf32> to vector<1x8x16xf32>
    %184 = tpu.concatenate %182, %183 in 0 : vector<1x8x16xf32>, vector<1x8x16xf32> -> vector<2x8x16xf32>
    %185 = vector.extract_strided_slice %178 {offsets = [0, 0], sizes = [8, 16], strides = [1, 1]} : vector<8x32xf32> to vector<8x16xf32>
    %186 = vector.extract_strided_slice %178 {offsets = [0, 16], sizes = [8, 16], strides = [1, 1]} : vector<8x32xf32> to vector<8x16xf32>
    %187 = vector.shape_cast %185 : vector<8x16xf32> to vector<1x8x16xf32>
    %188 = vector.shape_cast %186 : vector<8x16xf32> to vector<1x8x16xf32>
    %189 = tpu.concatenate %187, %188 in 0 : vector<1x8x16xf32>, vector<1x8x16xf32> -> vector<2x8x16xf32>
    %190 = vector.extract_strided_slice %179 {offsets = [0, 0], sizes = [8, 16], strides = [1, 1]} : vector<8x32xf32> to vector<8x16xf32>
    %191 = vector.extract_strided_slice %179 {offsets = [0, 16], sizes = [8, 16], strides = [1, 1]} : vector<8x32xf32> to vector<8x16xf32>
    %192 = vector.shape_cast %190 : vector<8x16xf32> to vector<1x8x16xf32>
    %193 = vector.shape_cast %191 : vector<8x16xf32> to vector<1x8x16xf32>
    %194 = tpu.concatenate %192, %193 in 0 : vector<1x8x16xf32>, vector<1x8x16xf32> -> vector<2x8x16xf32>
    "tpu.trace_start"() <{level = 10 : i32, message = "hqd,hkd->hqk"}> : () -> ()
    %cst_77 = arith.constant dense<0.000000e+00> : vector<2x8x8xf32>
    %195 = tpu.matmul %184, %189, %cst_77 {dimension_numbers = #tpu.dot_dimension_numbers<[2], [2], [1], [1], [0, 0, 0, 1, 1, 1], [0], [0]>} : vector<2x8x16xf32>, vector<2x8x16xf32>, vector<2x8x8xf32> -> vector<2x8x8xf32>
    "tpu.trace_stop"() : () -> ()
    %196 = vector.shape_cast %33 : vector<1x8xf32> to vector<1x1x8xf32>
    %197 = vector.broadcast %196 : vector<1x1x8xf32> to vector<2x8x8xf32>
    %198 = arith.addf %195, %197 : vector<2x8x8xf32>
    %cst_78 = arith.constant dense<0xFF800000> : vector<2x8xf32>
    %199 = vector.multi_reduction <maximumf>, %198, %cst_78 [2] : vector<2x8x8xf32> to vector<2x8xf32>
    %200 = vector.shape_cast %199 : vector<2x8xf32> to vector<2x8x1xf32>
    %201 = vector.broadcast %200 : vector<2x8x1xf32> to vector<2x8x8xf32>
    %202 = arith.subf %198, %201 : vector<2x8x8xf32>
    %203 = math.exp %202 : vector<2x8x8xf32>
    %cst_79 = arith.constant dense<0.000000e+00> : vector<2x8xf32>
    %204 = vector.multi_reduction <add>, %203, %cst_79 [2] : vector<2x8x8xf32> to vector<2x8xf32>
    %205 = vector.shape_cast %204 : vector<2x8xf32> to vector<2x8x1xf32>
    %206 = tpu.reciprocal %205 {approx = true} : vector<2x8x1xf32> -> vector<2x8x1xf32>
    %207 = vector.broadcast %206 : vector<2x8x1xf32> to vector<2x8x8xf32>
    %208 = arith.mulf %203, %207 : vector<2x8x8xf32>
    "tpu.trace_start"() <{level = 10 : i32, message = "hqk,hkd->hqd"}> : () -> ()
    %cst_80 = arith.constant dense<0.000000e+00> : vector<2x8x16xf32>
    %209 = tpu.matmul %208, %194, %cst_80 {dimension_numbers = #tpu.dot_dimension_numbers<[2], [1], [1], [2], [0, 0, 0, 1, 1, 2], [0], [0]>} : vector<2x8x8xf32>, vector<2x8x16xf32>, vector<2x8x16xf32> -> vector<2x8x16xf32>
    "tpu.trace_stop"() : () -> ()
    %c1_81 = arith.constant 1 : index
    %c0_82 = arith.constant 0 : index
    %c0_83 = arith.constant 0 : index
    %210 = vector.load %arg7[%c1_81, %c0_82, %c0_83] : memref<2x32x32xf32, #tpu.memory_space<vmem>>, vector<1x32x32xf32>
    %211 = vector.shape_cast %210 : vector<1x32x32xf32> to vector<32x32xf32>
    %c1_84 = arith.constant 1 : index
    %c0_85 = arith.constant 0 : index
    %c0_86 = arith.constant 0 : index
    %212 = vector.load %arg8[%c1_84, %c0_85, %c0_86] : memref<2x1x32xf32, #tpu.memory_space<vmem>>, vector<1x1x32xf32>
    %213 = vector.shape_cast %212 : vector<1x1x32xf32> to vector<1x32xf32>
    %214 = vector.extract_strided_slice %209 {offsets = [0, 0, 0], sizes = [1, 8, 16], strides = [1, 1, 1]} : vector<2x8x16xf32> to vector<1x8x16xf32>
    %215 = vector.shape_cast %214 : vector<1x8x16xf32> to vector<8x16xf32>
    %216 = vector.extract_strided_slice %211 {offsets = [0, 0], sizes = [16, 32], strides = [1, 1]} : vector<32x32xf32> to vector<16x32xf32>
    %cst_87 = arith.constant dense<0.000000e+00> : vector<8x32xf32>
    %217 = tpu.matmul %215, %216, %cst_87 {dimension_numbers = #tpu.dot_dimension_numbers<[1], [0], [0], [1], [0, 0, 1, 1], [], []>} : vector<8x16xf32>, vector<16x32xf32>, vector<8x32xf32> -> vector<8x32xf32>
    %218 = vector.broadcast %213 : vector<1x32xf32> to vector<8x32xf32>
    %219 = arith.addf %218, %217 : vector<8x32xf32>
    %220 = vector.extract_strided_slice %209 {offsets = [1, 0, 0], sizes = [1, 8, 16], strides = [1, 1, 1]} : vector<2x8x16xf32> to vector<1x8x16xf32>
    %221 = vector.shape_cast %220 : vector<1x8x16xf32> to vector<8x16xf32>
    %222 = vector.extract_strided_slice %211 {offsets = [16, 0], sizes = [16, 32], strides = [1, 1]} : vector<32x32xf32> to vector<16x32xf32>
    %cst_88 = arith.constant dense<0.000000e+00> : vector<8x32xf32>
    %223 = tpu.matmul %221, %222, %cst_88 {dimension_numbers = #tpu.dot_dimension_numbers<[1], [0], [0], [1], [0, 0, 1, 1], [], []>} : vector<8x16xf32>, vector<16x32xf32>, vector<8x32xf32> -> vector<8x32xf32>
    %224 = arith.addf %219, %223 : vector<8x32xf32>
    %225 = arith.addf %169, %224 : vector<8x32xf32>
    %c1_89 = arith.constant 1 : index
    %c0_90 = arith.constant 0 : index
    %c0_91 = arith.constant 0 : index
    %226 = vector.load %arg9[%c1_89, %c0_90, %c0_91] : memref<2x1x32xf32, #tpu.memory_space<vmem>>, vector<1x1x32xf32>
    %227 = vector.shape_cast %226 : vector<1x1x32xf32> to vector<1x32xf32>
    %c1_92 = arith.constant 1 : index
    %c0_93 = arith.constant 0 : index
    %c0_94 = arith.constant 0 : index
    %228 = vector.load %arg10[%c1_92, %c0_93, %c0_94] : memref<2x1x32xf32, #tpu.memory_space<vmem>>, vector<1x1x32xf32>
    %229 = vector.shape_cast %228 : vector<1x1x32xf32> to vector<1x32xf32>
    %cst_95 = arith.constant dense<0.000000e+00> : vector<8xf32>
    %230 = vector.multi_reduction <add>, %225, %cst_95 [1] : vector<8x32xf32> to vector<8xf32>
    %231 = vector.shape_cast %230 : vector<8xf32> to vector<8x1xf32>
    %cst_96 = arith.constant 3.200000e+01 : f32
    %232 = vector.broadcast %cst_96 : f32 to vector<8x1xf32>
    %233 = arith.divf %231, %232 : vector<8x1xf32>
    %234 = vector.broadcast %233 : vector<8x1xf32> to vector<8x32xf32>
    %235 = arith.subf %225, %234 : vector<8x32xf32>
    %236 = arith.mulf %235, %235 : vector<8x32xf32>
    %cst_97 = arith.constant dense<0.000000e+00> : vector<8xf32>
    %237 = vector.multi_reduction <add>, %236, %cst_97 [1] : vector<8x32xf32> to vector<8xf32>
    %238 = vector.shape_cast %237 : vector<8xf32> to vector<8x1xf32>
    %cst_98 = arith.constant 3.200000e+01 : f32
    %239 = vector.broadcast %cst_98 : f32 to vector<8x1xf32>
    %240 = arith.divf %238, %239 : vector<8x1xf32>
    %241 = vector.broadcast %233 : vector<8x1xf32> to vector<8x32xf32>
    %242 = arith.subf %225, %241 : vector<8x32xf32>
    %cst_99 = arith.constant 9.99999974E-6 : f32
    %243 = vector.broadcast %cst_99 : f32 to vector<8x1xf32>
    %244 = arith.addf %240, %243 : vector<8x1xf32>
    %245 = math.rsqrt %244 : vector<8x1xf32>
    %246 = vector.broadcast %245 : vector<8x1xf32> to vector<8x32xf32>
    %247 = arith.mulf %242, %246 : vector<8x32xf32>
    %248 = vector.broadcast %227 : vector<1x32xf32> to vector<8x32xf32>
    %249 = arith.mulf %247, %248 : vector<8x32xf32>
    %250 = vector.broadcast %229 : vector<1x32xf32> to vector<8x32xf32>
    %251 = arith.addf %249, %250 : vector<8x32xf32>
    %c1_100 = arith.constant 1 : index
    %c0_101 = arith.constant 0 : index
    %c0_102 = arith.constant 0 : index
    %252 = vector.load %arg11[%c1_100, %c0_101, %c0_102] : memref<2x32x64xf32, #tpu.memory_space<vmem>>, vector<1x32x64xf32>
    %253 = vector.shape_cast %252 : vector<1x32x64xf32> to vector<32x64xf32>
    %cst_103 = arith.constant dense<0.000000e+00> : vector<8x64xf32>
    %254 = tpu.matmul %251, %253, %cst_103 {dimension_numbers = #tpu.dot_dimension_numbers<[1], [0], [0], [1], [0, 0, 1, 1], [], []>} : vector<8x32xf32>, vector<32x64xf32>, vector<8x64xf32> -> vector<8x64xf32>
    %c1_104 = arith.constant 1 : index
    %c0_105 = arith.constant 0 : index
    %c0_106 = arith.constant 0 : index
    %255 = vector.load %arg12[%c1_104, %c0_105, %c0_106] : memref<2x1x64xf32, #tpu.memory_space<vmem>>, vector<1x1x64xf32>
    %256 = vector.shape_cast %255 : vector<1x1x64xf32> to vector<1x64xf32>
    %257 = vector.broadcast %256 : vector<1x64xf32> to vector<8x64xf32>
    %258 = arith.addf %254, %257 : vector<8x64xf32>
    %259 = arith.mulf %258, %258 : vector<8x64xf32>
    %260 = arith.mulf %258, %259 : vector<8x64xf32>
    %cst_107 = arith.constant 4.471500e-02 : f32
    %261 = vector.broadcast %cst_107 : f32 to vector<8x64xf32>
    %262 = arith.mulf %261, %260 : vector<8x64xf32>
    %263 = arith.addf %258, %262 : vector<8x64xf32>
    %cst_108 = arith.constant 0.797884583 : f32
    %264 = vector.broadcast %cst_108 : f32 to vector<8x64xf32>
    %265 = arith.mulf %264, %263 : vector<8x64xf32>
    %266 = math.tanh %265 : vector<8x64xf32>
    %cst_109 = arith.constant 1.000000e+00 : f32
    %267 = vector.broadcast %cst_109 : f32 to vector<8x64xf32>
    %268 = arith.addf %267, %266 : vector<8x64xf32>
    %cst_110 = arith.constant 5.000000e-01 : f32
    %269 = vector.broadcast %cst_110 : f32 to vector<8x64xf32>
    %270 = arith.mulf %269, %268 : vector<8x64xf32>
    %271 = arith.mulf %258, %270 : vector<8x64xf32>
    %c1_111 = arith.constant 1 : index
    %c0_112 = arith.constant 0 : index
    %c0_113 = arith.constant 0 : index
    %272 = vector.load %arg13[%c1_111, %c0_112, %c0_113] : memref<2x64x32xf32, #tpu.memory_space<vmem>>, vector<1x64x32xf32>
    %273 = vector.shape_cast %272 : vector<1x64x32xf32> to vector<64x32xf32>
    %cst_114 = arith.constant dense<0.000000e+00> : vector<8x32xf32>
    %274 = tpu.matmul %271, %273, %cst_114 {dimension_numbers = #tpu.dot_dimension_numbers<[1], [0], [0], [1], [0, 0, 1, 1], [], []>} : vector<8x64xf32>, vector<64x32xf32>, vector<8x32xf32> -> vector<8x32xf32>
    %c1_115 = arith.constant 1 : index
    %c0_116 = arith.constant 0 : index
    %c0_117 = arith.constant 0 : index
    %275 = vector.load %arg14[%c1_115, %c0_116, %c0_117] : memref<2x1x32xf32, #tpu.memory_space<vmem>>, vector<1x1x32xf32>
    %276 = vector.shape_cast %275 : vector<1x1x32xf32> to vector<1x32xf32>
    %277 = vector.broadcast %276 : vector<1x32xf32> to vector<8x32xf32>
    %278 = arith.addf %274, %277 : vector<8x32xf32>
    %279 = arith.addf %251, %278 : vector<8x32xf32>
    %c1_118 = arith.constant 1 : index
    %c0_119 = arith.constant 0 : index
    %c0_120 = arith.constant 0 : index
    %280 = vector.load %arg15[%c1_118, %c0_119, %c0_120] : memref<2x1x32xf32, #tpu.memory_space<vmem>>, vector<1x1x32xf32>
    %281 = vector.shape_cast %280 : vector<1x1x32xf32> to vector<1x32xf32>
    %c1_121 = arith.constant 1 : index
    %c0_122 = arith.constant 0 : index
    %c0_123 = arith.constant 0 : index
    %282 = vector.load %arg16[%c1_121, %c0_122, %c0_123] : memref<2x1x32xf32, #tpu.memory_space<vmem>>, vector<1x1x32xf32>
    %283 = vector.shape_cast %282 : vector<1x1x32xf32> to vector<1x32xf32>
    %cst_124 = arith.constant dense<0.000000e+00> : vector<8xf32>
    %284 = vector.multi_reduction <add>, %279, %cst_124 [1] : vector<8x32xf32> to vector<8xf32>
    %285 = vector.shape_cast %284 : vector<8xf32> to vector<8x1xf32>
    %cst_125 = arith.constant 3.200000e+01 : f32
    %286 = vector.broadcast %cst_125 : f32 to vector<8x1xf32>
    %287 = arith.divf %285, %286 : vector<8x1xf32>
    %288 = vector.broadcast %287 : vector<8x1xf32> to vector<8x32xf32>
    %289 = arith.subf %279, %288 : vector<8x32xf32>
    %290 = arith.mulf %289, %289 : vector<8x32xf32>
    %cst_126 = arith.constant dense<0.000000e+00> : vector<8xf32>
    %291 = vector.multi_reduction <add>, %290, %cst_126 [1] : vector<8x32xf32> to vector<8xf32>
    %292 = vector.shape_cast %291 : vector<8xf32> to vector<8x1xf32>
    %cst_127 = arith.constant 3.200000e+01 : f32
    %293 = vector.broadcast %cst_127 : f32 to vector<8x1xf32>
    %294 = arith.divf %292, %293 : vector<8x1xf32>
    %295 = vector.broadcast %287 : vector<8x1xf32> to vector<8x32xf32>
    %296 = arith.subf %279, %295 : vector<8x32xf32>
    %cst_128 = arith.constant 9.99999974E-6 : f32
    %297 = vector.broadcast %cst_128 : f32 to vector<8x1xf32>
    %298 = arith.addf %294, %297 : vector<8x1xf32>
    %299 = math.rsqrt %298 : vector<8x1xf32>
    %300 = vector.broadcast %299 : vector<8x1xf32> to vector<8x32xf32>
    %301 = arith.mulf %296, %300 : vector<8x32xf32>
    %302 = vector.broadcast %281 : vector<1x32xf32> to vector<8x32xf32>
    %303 = arith.mulf %301, %302 : vector<8x32xf32>
    %304 = vector.broadcast %283 : vector<1x32xf32> to vector<8x32xf32>
    %305 = arith.addf %303, %304 : vector<8x32xf32>
    %306 = vector.extract_strided_slice %305 {offsets = [0, 0], sizes = [1, 32], strides = [1, 1]} : vector<8x32xf32> to vector<1x32xf32>
    %c0_129 = arith.constant 0 : index
    %c0_130 = arith.constant 0 : index
    %307 = vector.load %arg17[%c0_129, %c0_130] : memref<32x32xf32, #tpu.memory_space<vmem>>, vector<32x32xf32>
    %cst_131 = arith.constant dense<0.000000e+00> : vector<1x32xf32>
    %308 = tpu.matmul %306, %307, %cst_131 {dimension_numbers = #tpu.dot_dimension_numbers<[1], [0], [0], [1], [0, 0, 1, 1], [], []>} : vector<1x32xf32>, vector<32x32xf32>, vector<1x32xf32> -> vector<1x32xf32>
    %c0_132 = arith.constant 0 : index
    %c0_133 = arith.constant 0 : index
    %309 = vector.load %arg18[%c0_132, %c0_133] : memref<1x32xf32, #tpu.memory_space<vmem>>, vector<1x32xf32>
    %310 = arith.addf %308, %309 : vector<1x32xf32>
    %311 = math.tanh %310 : vector<1x32xf32>
    %c0_134 = arith.constant 0 : index
    %c0_135 = arith.constant 0 : index
    %312 = vector.load %arg19[%c0_134, %c0_135] : memref<32x128xf32, #tpu.memory_space<vmem>>, vector<32x128xf32>
    %cst_136 = arith.constant dense<0.000000e+00> : vector<1x128xf32>
    %313 = tpu.matmul %311, %312, %cst_136 {dimension_numbers = #tpu.dot_dimension_numbers<[1], [0], [0], [1], [0, 0, 1, 1], [], []>} : vector<1x32xf32>, vector<32x128xf32>, vector<1x128xf32> -> vector<1x128xf32>
    %c0_137 = arith.constant 0 : index
    %c0_138 = arith.constant 0 : index
    %314 = vector.load %arg20[%c0_137, %c0_138] : memref<1x128xf32, #tpu.memory_space<vmem>>, vector<1x128xf32>
    %315 = arith.addf %313, %314 : vector<1x128xf32>
    %c0_139 = arith.constant 0 : index
    %c0_140 = arith.constant 0 : index
    %c0_141 = arith.constant 0 : index
    %316 = vector.load %arg21[%c0_139, %c0_140, %c0_141] : memref<1x1x128xf32, #tpu.memory_space<vmem>>, vector<1x1x128xf32>
    %317 = vector.shape_cast %316 : vector<1x1x128xf32> to vector<1x128xf32>
    %318 = vector.shape_cast %315 : vector<1x128xf32> to vector<1x1x128xf32>
    tpu.vector_store %arg21[%c0_139, %c0_140, %c0_141], %318 {strides = array<i32>} : memref<1x1x128xf32, #tpu.memory_space<vmem>>, vector<1x1x128xf32>,
    return
  }
  func.func @transform_0(%arg0: i32, %arg1: memref<2xi32, #tpu.memory_space<smem>>) -> (i32, i32, i32) {
    %c0_i32 = arith.constant 0 : i32
    %c0_i32_0 = arith.constant 0 : i32
    %c0_i32_1 = arith.constant 0 : i32
    return %arg0, %c0_i32, %c0_i32_0 : i32, i32, i32
  }
  func.func @transform_1(%arg0: i32, %arg1: memref<2xi32, #tpu.memory_space<smem>>) -> (i32, i32) {
    %c0_i32 = arith.constant 0 : i32
    %c0_i32_0 = arith.constant 0 : i32
    %c0_i32_1 = arith.constant 0 : i32
    return %c0_i32, %c0_i32_0 : i32, i32
  }
  func.func @transform_2(%arg0: i32, %arg1: memref<2xi32, #tpu.memory_space<smem>>) -> (i32, i32) {
    %c0_i32 = arith.constant 0 : i32
    %c0_i32_0 = arith.constant 0 : i32
    %c0_i32_1 = arith.constant 0 : i32
    return %c0_i32, %c0_i32_0 : i32, i32
  }
  func.func @transform_3(%arg0: i32, %arg1: memref<2xi32, #tpu.memory_space<smem>>) -> (i32, i32, i32) {
    %c0_i32 = arith.constant 0 : i32
    %c0_i32_0 = arith.constant 0 : i32
    %c0_i32_1 = arith.constant 0 : i32
    %c0_i32_2 = arith.constant 0 : i32
    return %c0_i32, %c0_i32_0, %c0_i32_1 : i32, i32, i32
  }
  func.func @transform_4(%arg0: i32, %arg1: memref<2xi32, #tpu.memory_space<smem>>) -> (i32, i32, i32) {
    %c0_i32 = arith.constant 0 : i32
    %c0_i32_0 = arith.constant 0 : i32
    %c0_i32_1 = arith.constant 0 : i32
    %c0_i32_2 = arith.constant 0 : i32
    return %c0_i32, %c0_i32_0, %c0_i32_1 : i32, i32, i32
  }
  func.func @transform_5(%arg0: i32, %arg1: memref<2xi32, #tpu.memory_space<smem>>) -> (i32, i32, i32) {
    %c0_i32 = arith.constant 0 : i32
    %c0_i32_0 = arith.constant 0 : i32
    %c0_i32_1 = arith.constant 0 : i32
    %c0_i32_2 = arith.constant 0 : i32
    return %c0_i32, %c0_i32_0, %c0_i32_1 : i32, i32, i32
  }
  func.func @transform_6(%arg0: i32, %arg1: memref<2xi32, #tpu.memory_space<smem>>) -> (i32, i32, i32) {
    %c0_i32 = arith.constant 0 : i32
    %c0_i32_0 = arith.constant 0 : i32
    %c0_i32_1 = arith.constant 0 : i32
    %c0_i32_2 = arith.constant 0 : i32
    return %c0_i32, %c0_i32_0, %c0_i32_1 : i32, i32, i32
  }
  func.func @transform_7(%arg0: i32, %arg1: memref<2xi32, #tpu.memory_space<smem>>) -> (i32, i32, i32) {
    %c0_i32 = arith.constant 0 : i32
    %c0_i32_0 = arith.constant 0 : i32
    %c0_i32_1 = arith.constant 0 : i32
    %c0_i32_2 = arith.constant 0 : i32
    return %c0_i32, %c0_i32_0, %c0_i32_1 : i32, i32, i32
  }
  func.func @transform_8(%arg0: i32, %arg1: memref<2xi32, #tpu.memory_space<smem>>) -> (i32, i32, i32) {
    %c0_i32 = arith.constant 0 : i32
    %c0_i32_0 = arith.constant 0 : i32
    %c0_i32_1 = arith.constant 0 : i32
    %c0_i32_2 = arith.constant 0 : i32
    return %c0_i32, %c0_i32_0, %c0_i32_1 : i32, i32, i32
  }
  func.func @transform_9(%arg0: i32, %arg1: memref<2xi32, #tpu.memory_space<smem>>) -> (i32, i32, i32) {
    %c0_i32 = arith.constant 0 : i32
    %c0_i32_0 = arith.constant 0 : i32
    %c0_i32_1 = arith.constant 0 : i32
    %c0_i32_2 = arith.constant 0 : i32
    return %c0_i32, %c0_i32_0, %c0_i32_1 : i32, i32, i32
  }
  func.func @transform_10(%arg0: i32, %arg1: memref<2xi32, #tpu.memory_space<smem>>) -> (i32, i32, i32) {
    %c0_i32 = arith.constant 0 : i32
    %c0_i32_0 = arith.constant 0 : i32
    %c0_i32_1 = arith.constant 0 : i32
    %c0_i32_2 = arith.constant 0 : i32
    return %c0_i32, %c0_i32_0, %c0_i32_1 : i32, i32, i32
  }
  func.func @transform_11(%arg0: i32, %arg1: memref<2xi32, #tpu.memory_space<smem>>) -> (i32, i32, i32) {
    %c0_i32 = arith.constant 0 : i32
    %c0_i32_0 = arith.constant 0 : i32
    %c0_i32_1 = arith.constant 0 : i32
    %c0_i32_2 = arith.constant 0 : i32
    return %c0_i32, %c0_i32_0, %c0_i32_1 : i32, i32, i32
  }
  func.func @transform_12(%arg0: i32, %arg1: memref<2xi32, #tpu.memory_space<smem>>) -> (i32, i32, i32) {
    %c0_i32 = arith.constant 0 : i32
    %c0_i32_0 = arith.constant 0 : i32
    %c0_i32_1 = arith.constant 0 : i32
    %c0_i32_2 = arith.constant 0 : i32
    return %c0_i32, %c0_i32_0, %c0_i32_1 : i32, i32, i32
  }
  func.func @transform_13(%arg0: i32, %arg1: memref<2xi32, #tpu.memory_space<smem>>) -> (i32, i32, i32) {
    %c0_i32 = arith.constant 0 : i32
    %c0_i32_0 = arith.constant 0 : i32
    %c0_i32_1 = arith.constant 0 : i32
    %c0_i32_2 = arith.constant 0 : i32
    return %c0_i32, %c0_i32_0, %c0_i32_1 : i32, i32, i32
  }
  func.func @transform_14(%arg0: i32, %arg1: memref<2xi32, #tpu.memory_space<smem>>) -> (i32, i32, i32) {
    %c0_i32 = arith.constant 0 : i32
    %c0_i32_0 = arith.constant 0 : i32
    %c0_i32_1 = arith.constant 0 : i32
    %c0_i32_2 = arith.constant 0 : i32
    return %c0_i32, %c0_i32_0, %c0_i32_1 : i32, i32, i32
  }
  func.func @transform_15(%arg0: i32, %arg1: memref<2xi32, #tpu.memory_space<smem>>) -> (i32, i32) {
    %c0_i32 = arith.constant 0 : i32
    %c0_i32_0 = arith.constant 0 : i32
    %c0_i32_1 = arith.constant 0 : i32
    return %c0_i32, %c0_i32_0 : i32, i32
  }
  func.func @transform_16(%arg0: i32, %arg1: memref<2xi32, #tpu.memory_space<smem>>) -> (i32, i32) {
    %c0_i32 = arith.constant 0 : i32
    %c0_i32_0 = arith.constant 0 : i32
    %c0_i32_1 = arith.constant 0 : i32
    return %c0_i32, %c0_i32_0 : i32, i32
  }
  func.func @transform_17(%arg0: i32, %arg1: memref<2xi32, #tpu.memory_space<smem>>) -> (i32, i32) {
    %c0_i32 = arith.constant 0 : i32
    %c0_i32_0 = arith.constant 0 : i32
    %c0_i32_1 = arith.constant 0 : i32
    return %c0_i32, %c0_i32_0 : i32, i32
  }
  func.func @transform_18(%arg0: i32, %arg1: memref<2xi32, #tpu.memory_space<smem>>) -> (i32, i32) {
    %c0_i32 = arith.constant 0 : i32
    %c0_i32_0 = arith.constant 0 : i32
    %c0_i32_1 = arith.constant 0 : i32
    return %c0_i32, %c0_i32_0 : i32, i32
  }
  func.func @transform_19(%arg0: i32, %arg1: memref<2xi32, #tpu.memory_space<smem>>) -> (i32, i32, i32) {
    %c0_i32 = arith.constant 0 : i32
    %c0_i32_0 = arith.constant 0 : i32
    %c0_i32_1 = arith.constant 0 : i32
    return %arg0, %c0_i32, %c0_i32_0 : i32, i32, i32
  }
}

</mosaic_0001>

<llo_original>
// kernel: model_forward.1
$region0: #{model_forward.1}
  #allocation0 [shape = 'u32[]', space=smem, size = 0x4, offset = 0x4, fixed_abs, tag = 'smem constant byte address 0x4 - core index']
  #allocation1 [shape = 'u32[72,128]{1,0:T(1,128)}', space=vmem, size = 0x9000, scoped, tag = 'internal scratch']
  #allocation2 [shape = 's32[1]{0}', space=sflag, size = 0x4, scoped, tag = 'scoped memory for model_forward.1']
  #allocation3 [shape = 'u8[512]{0}', space=smem, size = 0x200, scoped, tag = 'prefetched SMEM operand 0']
  %s0 = inlined_call_operand.vmem [shape: s32[2], index: 0, kind: input, shape index: {}]
  %s1 = inlined_call_operand.vmem [shape: f32[2,8,32], index: 1, kind: input, shape index: {}]
  %s2 = inlined_call_operand.vmem [shape: f32[1,32], index: 2, kind: input, shape index: {}]
  %s3 = inlined_call_operand.vmem [shape: f32[1,32], index: 3, kind: input, shape index: {}]
  %s4 = inlined_call_operand.vmem [shape: f32[2,32,96], index: 4, kind: input, shape index: {}]
  %s5 = inlined_call_operand.vmem [shape: f32[2,1,96], index: 5, kind: input, shape index: {}]
  %s6 = inlined_call_operand.vmem [shape: f32[2,32,32], index: 6, kind: input, shape index: {}]
  %s7 = inlined_call_operand.vmem [shape: f32[2,1,32], index: 7, kind: input, shape index: {}]
  %s8 = inlined_call_operand.vmem [shape: f32[2,1,32], index: 8, kind: input, shape index: {}]
  %s9 = inlined_call_operand.vmem [shape: f32[2,1,32], index: 9, kind: input, shape index: {}]
  %s10 = inlined_call_operand.vmem [shape: f32[2,32,64], index: 10, kind: input, shape index: {}]
  %s11 = inlined_call_operand.vmem [shape: f32[2,1,64], index: 11, kind: input, shape index: {}]
  %s12 = inlined_call_operand.vmem [shape: f32[2,64,32], index: 12, kind: input, shape index: {}]
  %s13 = inlined_call_operand.vmem [shape: f32[2,1,32], index: 13, kind: input, shape index: {}]
  %s14 = inlined_call_operand.vmem [shape: f32[2,1,32], index: 14, kind: input, shape index: {}]
  %s15 = inlined_call_operand.vmem [shape: f32[2,1,32], index: 15, kind: input, shape index: {}]
  %s16 = inlined_call_operand.vmem [shape: f32[32,32], index: 16, kind: input, shape index: {}]
  %s17 = inlined_call_operand.vmem [shape: f32[1,32], index: 17, kind: input, shape index: {}]
  %s18 = inlined_call_operand.vmem [shape: f32[32,128], index: 18, kind: input, shape index: {}]
  %s19 = inlined_call_operand.vmem [shape: f32[1,128], index: 19, kind: input, shape index: {}]
  %s20 = inlined_call_operand.hbm [shape: f32[2,1,128], index: 20, kind: output, shape index: {}]
  %s21 = sld [smem:[#allocation0]]
  $region109: #{model_forward.1} parent=0
    _
  %s23 = ssub.s32 1, %s21
  %s24 = scalar_select 0, %s23, %s21
  %s26 = sshll.u32 %s0, 4
  %s27 = int_to_ptr.vmem [resolvable:$true] %s26
  %29 = dma.vmem_to_smem %s27, 16, [#allocation3], [#allocation2]
  %31 = dma.done [#allocation2], 16
  %32 = sfence
  $region1: #{model_forward.1} parent=0
    #allocation4 [shape = 'u8[1024]{0}', space=vmem, size = 0x400, scoped, tag = 'output window, operand 0']
    #allocation5 [shape = 's32[2]{0}', space=sflag, size = 0x8, scoped, tag = 'scoped memory for model_forward.1']
    %33 = vsyncpa [#allocation5], 0
    %s34 = scalar_lea.sflag [#allocation5], 1
    %35 = vsyncpa %s34, 0
    loop: start=0, step=1, limit=4
    $region2: #{model_forward.1} parent=1 // loop_pre_header
      _
    $region3: #{model_forward.1} parent=1 // loop_header
      %s37 = sphi 0, %s41
      %p38 = scmp.ge.s32.totalorder %s37, 4
      %s47 = sphi 0, %s49
      %s50 = sphi 0, %s47
      %s51 = sphi 0, %s50
      %s67 = sphi 0, %s51
      %s71 = sphi 0, %s71
      %s73 = sphi 0, %s71
      %s74 = sphi 0, %s73
      %s88 = sphi 0, %s74
      %s92 = sphi 0, %s92
      %s94 = sphi 0, %s92
      %s95 = sphi 0, %s94
      %s109 = sphi 0, %s95
      %s113 = sphi 0, %s113
      %s115 = sphi 0, %s113
      %s116 = sphi 0, %s115
      %s130 = sphi 0, %s116
      %s134 = sphi 0, %s134
      %s136 = sphi 0, %s134
      %s137 = sphi 0, %s136
      %s151 = sphi 0, %s137
      %s155 = sphi 0, %s155
      %s157 = sphi 0, %s155
      %s158 = sphi 0, %s157
      %s172 = sphi 0, %s158
      %s176 = sphi 0, %s176
      %s178 = sphi 0, %s176
      %s179 = sphi 0, %s178
      %s193 = sphi 0, %s179
      %s197 = sphi 0, %s197
      %s199 = sphi 0, %s197
      %s200 = sphi 0, %s199
      %s214 = sphi 0, %s200
      %s218 = sphi 0, %s218
      %s220 = sphi 0, %s218
      %s221 = sphi 0, %s220
      %s235 = sphi 0, %s221
      %s239 = sphi 0, %s239
      %s241 = sphi 0, %s239
      %s242 = sphi 0, %s241
      %s256 = sphi 0, %s242
      %s260 = sphi 0, %s260
      %s262 = sphi 0, %s260
      %s263 = sphi 0, %s262
      %s277 = sphi 0, %s263
      %s281 = sphi 0, %s281
      %s283 = sphi 0, %s281
      %s284 = sphi 0, %s283
      %s298 = sphi 0, %s284
      %s302 = sphi 0, %s302
      %s304 = sphi 0, %s302
      %s305 = sphi 0, %s304
      %s319 = sphi 0, %s305
      %s323 = sphi 0, %s323
      %s325 = sphi 0, %s323
      %s326 = sphi 0, %s325
      %s340 = sphi 0, %s326
      %s344 = sphi 0, %s344
      %s346 = sphi 0, %s344
      %s347 = sphi 0, %s346
      %s361 = sphi 0, %s347
      %s365 = sphi 0, %s365
      %s367 = sphi 0, %s365
      %s368 = sphi 0, %s367
      %s382 = sphi 0, %s368
      %s386 = sphi 0, %s386
      %s388 = sphi 0, %s386
      %s389 = sphi 0, %s388
      %s403 = sphi 0, %s389
      %s407 = sphi 0, %s407
      %s409 = sphi 0, %s407
      %s410 = sphi 0, %s409
      %s424 = sphi 0, %s410
      %s428 = sphi 0, %s428
      %s430 = sphi 0, %s428
      %s431 = sphi 0, %s430
      %s445 = sphi 0, %s431
      %s451 = sphi 0, %s453
      %s454 = sphi 0, %s451
      %s455 = sphi 0, %s454
      %s471 = sphi 0, %s455
    $region4: #{model_forward.1} parent=1 // loop_header_branch
      %40 = sbr.rel (%p38) target = $region8
    $region5: #{model_forward.1} parent=1 // loop_body
      %s42 = ssub.s32 %s37, 1
      %s43 = ssub.s32 %s37, 2
      %s44 = sadd.s32 %s37, 1
      %s45 = ssub.s32 %s37, %s44
      %p46 = scmp.eq.s32.totalorder %s45, 0
      %s48 = sadd.s32 %s47, 1
      %s49 = scalar_select %p46, %s47, %s48
      %p52 = pneg %p46
      %p53 = scmp.eq.s32.totalorder %s37, 1
      %p54 = por %p52, %p53
      %p55 = scmp.ne.s32.totalorder %s47, %s50
      %p56 = scmp.eq.s32.totalorder %s37, 0
      %p57 = por %p55, %p56
      %p58 = scmp.ne.s32.totalorder %s47, %s50
      %p59 = scmp.eq.s32.totalorder %s42, 1
      %p60 = por %p58, %p59
      %p61 = scmp.ne.s32.totalorder %s50, %s51
      %p62 = scmp.eq.s32.totalorder %s42, 0
      %p63 = por %p61, %p62
      %p64 = scmp.ne.s32.totalorder %s50, %s51
      %p65 = scmp.eq.s32.totalorder %s43, 1
      %p66 = por %p64, %p65
      %p68 = scmp.ne.s32.totalorder %s51, %s67
      %p69 = scmp.eq.s32.totalorder %s43, 0
      %p70 = por %p68, %p69
      %s72 = sadd.s32 %s71, 1
      %p75 = scmp.eq.s32.totalorder %s37, 1
      %p76 = scmp.ne.s32.totalorder %s71, %s73
      %p77 = scmp.eq.s32.totalorder %s37, 0
      %p78 = por %p76, %p77
      %p79 = scmp.ne.s32.totalorder %s71, %s73
      %p80 = scmp.eq.s32.totalorder %s42, 1
      %p81 = por %p79, %p80
      %p82 = scmp.ne.s32.totalorder %s73, %s74
      %p83 = scmp.eq.s32.totalorder %s42, 0
      %p84 = por %p82, %p83
      %p85 = scmp.ne.s32.totalorder %s73, %s74
      %p86 = scmp.eq.s32.totalorder %s43, 1
      %p87 = por %p85, %p86
      %p89 = scmp.ne.s32.totalorder %s74, %s88
      %p90 = scmp.eq.s32.totalorder %s43, 0
      %p91 = por %p89, %p90
      %s93 = sadd.s32 %s92, 1
      %p96 = scmp.eq.s32.totalorder %s37, 1
      %p97 = scmp.ne.s32.totalorder %s92, %s94
      %p98 = scmp.eq.s32.totalorder %s37, 0
      %p99 = por %p97, %p98
      %p100 = scmp.ne.s32.totalorder %s92, %s94
      %p101 = scmp.eq.s32.totalorder %s42, 1
      %p102 = por %p100, %p101
      %p103 = scmp.ne.s32.totalorder %s94, %s95
      %p104 = scmp.eq.s32.totalorder %s42, 0
      %p105 = por %p103, %p104
      %p106 = scmp.ne.s32.totalorder %s94, %s95
      %p107 = scmp.eq.s32.totalorder %s43, 1
      %p108 = por %p106, %p107
      %p110 = scmp.ne.s32.totalorder %s95, %s109
      %p111 = scmp.eq.s32.totalorder %s43, 0
      %p112 = por %p110, %p111
      %s114 = sadd.s32 %s113, 1
      %p117 = scmp.eq.s32.totalorder %s37, 1
      %p118 = scmp.ne.s32.totalorder %s113, %s115
      %p119 = scmp.eq.s32.totalorder %s37, 0
      %p120 = por %p118, %p119
      %p121 = scmp.ne.s32.totalorder %s113, %s115
      %p122 = scmp.eq.s32.totalorder %s42, 1
      %p123 = por %p121, %p122
      %p124 = scmp.ne.s32.totalorder %s115, %s116
      %p125 = scmp.eq.s32.totalorder %s42, 0
      %p126 = por %p124, %p125
      %p127 = scmp.ne.s32.totalorder %s115, %s116
      %p128 = scmp.eq.s32.totalorder %s43, 1
      %p129 = por %p127, %p128
      %p131 = scmp.ne.s32.totalorder %s116, %s130
      %p132 = scmp.eq.s32.totalorder %s43, 0
      %p133 = por %p131, %p132
      %s135 = sadd.s32 %s134, 1
      %p138 = scmp.eq.s32.totalorder %s37, 1
      %p139 = scmp.ne.s32.totalorder %s134, %s136
      %p140 = scmp.eq.s32.totalorder %s37, 0
      %p141 = por %p139, %p140
      %p142 = scmp.ne.s32.totalorder %s134, %s136
      %p143 = scmp.eq.s32.totalorder %s42, 1
      %p144 = por %p142, %p143
      %p145 = scmp.ne.s32.totalorder %s136, %s137
      %p146 = scmp.eq.s32.totalorder %s42, 0
      %p147 = por %p145, %p146
      %p148 = scmp.ne.s32.totalorder %s136, %s137
      %p149 = scmp.eq.s32.totalorder %s43, 1
      %p150 = por %p148, %p149
      %p152 = scmp.ne.s32.totalorder %s137, %s151
      %p153 = scmp.eq.s32.totalorder %s43, 0
      %p154 = por %p152, %p153
      %s156 = sadd.s32 %s155, 1
      %p159 = scmp.eq.s32.totalorder %s37, 1
      %p160 = scmp.ne.s32.totalorder %s155, %s157
      %p161 = scmp.eq.s32.totalorder %s37, 0
      %p162 = por %p160, %p161
      %p163 = scmp.ne.s32.totalorder %s155, %s157
      %p164 = scmp.eq.s32.totalorder %s42, 1
      %p165 = por %p163, %p164
      %p166 = scmp.ne.s32.totalorder %s157, %s158
      %p167 = scmp.eq.s32.totalorder %s42, 0
      %p168 = por %p166, %p167
      %p169 = scmp.ne.s32.totalorder %s157, %s158
      %p170 = scmp.eq.s32.totalorder %s43, 1
      %p171 = por %p169, %p170
      %p173 = scmp.ne.s32.totalorder %s158, %s172
      %p174 = scmp.eq.s32.totalorder %s43, 0
      %p175 = por %p173, %p174
      %s177 = sadd.s32 %s176, 1
      %p180 = scmp.eq.s32.totalorder %s37, 1
      %p181 = scmp.ne.s32.totalorder %s176, %s178
      %p182 = scmp.eq.s32.totalorder %s37, 0
      %p183 = por %p181, %p182
      %p184 = scmp.ne.s32.totalorder %s176, %s178
      %p185 = scmp.eq.s32.totalorder %s42, 1
      %p186 = por %p184, %p185
      %p187 = scmp.ne.s32.totalorder %s178, %s179
      %p188 = scmp.eq.s32.totalorder %s42, 0
      %p189 = por %p187, %p188
      %p190 = scmp.ne.s32.totalorder %s178, %s179
      %p191 = scmp.eq.s32.totalorder %s43, 1
      %p192 = por %p190, %p191
      %p194 = scmp.ne.s32.totalorder %s179, %s193
      %p195 = scmp.eq.s32.totalorder %s43, 0
      %p196 = por %p194, %p195
      %s198 = sadd.s32 %s197, 1
      %p201 = scmp.eq.s32.totalorder %s37, 1
      %p202 = scmp.ne.s32.totalorder %s197, %s199
      %p203 = scmp.eq.s32.totalorder %s37, 0
      %p204 = por %p202, %p203
      %p205 = scmp.ne.s32.totalorder %s197, %s199
      %p206 = scmp.eq.s32.totalorder %s42, 1
      %p207 = por %p205, %p206
      %p208 = scmp.ne.s32.totalorder %s199, %s200
      %p209 = scmp.eq.s32.totalorder %s42, 0
      %p210 = por %p208, %p209
      %p211 = scmp.ne.s32.totalorder %s199, %s200
      %p212 = scmp.eq.s32.totalorder %s43, 1
      %p213 = por %p211, %p212
      %p215 = scmp.ne.s32.totalorder %s200, %s214
      %p216 = scmp.eq.s32.totalorder %s43, 0
      %p217 = por %p215, %p216
      %s219 = sadd.s32 %s218, 1
      %p222 = scmp.eq.s32.totalorder %s37, 1
      %p223 = scmp.ne.s32.totalorder %s218, %s220
      %p224 = scmp.eq.s32.totalorder %s37, 0
      %p225 = por %p223, %p224
      %p226 = scmp.ne.s32.totalorder %s218, %s220
      %p227 = scmp.eq.s32.totalorder %s42, 1
      %p228 = por %p226, %p227
      %p229 = scmp.ne.s32.totalorder %s220, %s221
      %p230 = scmp.eq.s32.totalorder %s42, 0
      %p231 = por %p229, %p230
      %p232 = scmp.ne.s32.totalorder %s220, %s221
      %p233 = scmp.eq.s32.totalorder %s43, 1
      %p234 = por %p232, %p233
      %p236 = scmp.ne.s32.totalorder %s221, %s235
      %p237 = scmp.eq.s32.totalorder %s43, 0
      %p238 = por %p236, %p237
      %s240 = sadd.s32 %s239, 1
      %p243 = scmp.eq.s32.totalorder %s37, 1
      %p244 = scmp.ne.s32.totalorder %s239, %s241
      %p245 = scmp.eq.s32.totalorder %s37, 0
      %p246 = por %p244, %p245
      %p247 = scmp.ne.s32.totalorder %s239, %s241
      %p248 = scmp.eq.s32.totalorder %s42, 1
      %p249 = por %p247, %p248
      %p250 = scmp.ne.s32.totalorder %s241, %s242
      %p251 = scmp.eq.s32.totalorder %s42, 0
      %p252 = por %p250, %p251
      %p253 = scmp.ne.s32.totalorder %s241, %s242
      %p254 = scmp.eq.s32.totalorder %s43, 1
      %p255 = por %p253, %p254
      %p257 = scmp.ne.s32.totalorder %s242, %s256
      %p258 = scmp.eq.s32.totalorder %s43, 0
      %p259 = por %p257, %p258
      %s261 = sadd.s32 %s260, 1
      %p264 = scmp.eq.s32.totalorder %s37, 1
      %p265 = scmp.ne.s32.totalorder %s260, %s262
      %p266 = scmp.eq.s32.totalorder %s37, 0
      %p267 = por %p265, %p266
      %p268 = scmp.ne.s32.totalorder %s260, %s262
      %p269 = scmp.eq.s32.totalorder %s42, 1
      %p270 = por %p268, %p269
      %p271 = scmp.ne.s32.totalorder %s262, %s263
      %p272 = scmp.eq.s32.totalorder %s42, 0
      %p273 = por %p271, %p272
      %p274 = scmp.ne.s32.totalorder %s262, %s263
      %p275 = scmp.eq.s32.totalorder %s43, 1
      %p276 = por %p274, %p275
      %p278 = scmp.ne.s32.totalorder %s263, %s277
      %p279 = scmp.eq.s32.totalorder %s43, 0
      %p280 = por %p278, %p279
      %s282 = sadd.s32 %s281, 1
      %p285 = scmp.eq.s32.totalorder %s37, 1
      %p286 = scmp.ne.s32.totalorder %s281, %s283
      %p287 = scmp.eq.s32.totalorder %s37, 0
      %p288 = por %p286, %p287
      %p289 = scmp.ne.s32.totalorder %s281, %s283
      %p290 = scmp.eq.s32.totalorder %s42, 1
      %p291 = por %p289, %p290
      %p292 = scmp.ne.s32.totalorder %s283, %s284
      %p293 = scmp.eq.s32.totalorder %s42, 0
      %p294 = por %p292, %p293
      %p295 = scmp.ne.s32.totalorder %s283, %s284
      %p296 = scmp.eq.s32.totalorder %s43, 1
      %p297 = por %p295, %p296
      %p299 = scmp.ne.s32.totalorder %s284, %s298
      %p300 = scmp.eq.s32.totalorder %s43, 0
      %p301 = por %p299, %p300
      %s303 = sadd.s32 %s302, 1
      %p306 = scmp.eq.s32.totalorder %s37, 1
      %p307 = scmp.ne.s32.totalorder %s302, %s304
      %p308 = scmp.eq.s32.totalorder %s37, 0
      %p309 = por %p307, %p308
      %p310 = scmp.ne.s32.totalorder %s302, %s304
      %p311 = scmp.eq.s32.totalorder %s42, 1
      %p312 = por %p310, %p311
      %p313 = scmp.ne.s32.totalorder %s304, %s305
      %p314 = scmp.eq.s32.totalorder %s42, 0
      %p315 = por %p313, %p314
      %p316 = scmp.ne.s32.totalorder %s304, %s305
      %p317 = scmp.eq.s32.totalorder %s43, 1
      %p318 = por %p316, %p317
      %p320 = scmp.ne.s32.totalorder %s305, %s319
      %p321 = scmp.eq.s32.totalorder %s43, 0
      %p322 = por %p320, %p321
      %s324 = sadd.s32 %s323, 1
      %p327 = scmp.eq.s32.totalorder %s37, 1
      %p328 = scmp.ne.s32.totalorder %s323, %s325
      %p329 = scmp.eq.s32.totalorder %s37, 0
      %p330 = por %p328, %p329
      %p331 = scmp.ne.s32.totalorder %s323, %s325
      %p332 = scmp.eq.s32.totalorder %s42, 1
      %p333 = por %p331, %p332
      %p334 = scmp.ne.s32.totalorder %s325, %s326
      %p335 = scmp.eq.s32.totalorder %s42, 0
      %p336 = por %p334, %p335
      %p337 = scmp.ne.s32.totalorder %s325, %s326
      %p338 = scmp.eq.s32.totalorder %s43, 1
      %p339 = por %p337, %p338
      %p341 = scmp.ne.s32.totalorder %s326, %s340
      %p342 = scmp.eq.s32.totalorder %s43, 0
      %p343 = por %p341, %p342
      %s345 = sadd.s32 %s344, 1
      %p348 = scmp.eq.s32.totalorder %s37, 1
      %p349 = scmp.ne.s32.totalorder %s344, %s346
      %p350 = scmp.eq.s32.totalorder %s37, 0
      %p351 = por %p349, %p350
      %p352 = scmp.ne.s32.totalorder %s344, %s346
      %p353 = scmp.eq.s32.totalorder %s42, 1
      %p354 = por %p352, %p353
      %p355 = scmp.ne.s32.totalorder %s346, %s347
      %p356 = scmp.eq.s32.totalorder %s42, 0
      %p357 = por %p355, %p356
      %p358 = scmp.ne.s32.totalorder %s346, %s347
      %p359 = scmp.eq.s32.totalorder %s43, 1
      %p360 = por %p358, %p359
      %p362 = scmp.ne.s32.totalorder %s347, %s361
      %p363 = scmp.eq.s32.totalorder %s43, 0
      %p364 = por %p362, %p363
      %s366 = sadd.s32 %s365, 1
      %p369 = scmp.eq.s32.totalorder %s37, 1
      %p370 = scmp.ne.s32.totalorder %s365, %s367
      %p371 = scmp.eq.s32.totalorder %s37, 0
      %p372 = por %p370, %p371
      %p373 = scmp.ne.s32.totalorder %s365, %s367
      %p374 = scmp.eq.s32.totalorder %s42, 1
      %p375 = por %p373, %p374
      %p376 = scmp.ne.s32.totalorder %s367, %s368
      %p377 = scmp.eq.s32.totalorder %s42, 0
      %p378 = por %p376, %p377
      %p379 = scmp.ne.s32.totalorder %s367, %s368
      %p380 = scmp.eq.s32.totalorder %s43, 1
      %p381 = por %p379, %p380
      %p383 = scmp.ne.s32.totalorder %s368, %s382
      %p384 = scmp.eq.s32.totalorder %s43, 0
      %p385 = por %p383, %p384
      %s387 = sadd.s32 %s386, 1
      %p390 = scmp.eq.s32.totalorder %s37, 1
      %p391 = scmp.ne.s32.totalorder %s386, %s388
      %p392 = scmp.eq.s32.totalorder %s37, 0
      %p393 = por %p391, %p392
      %p394 = scmp.ne.s32.totalorder %s386, %s388
      %p395 = scmp.eq.s32.totalorder %s42, 1
      %p396 = por %p394, %p395
      %p397 = scmp.ne.s32.totalorder %s388, %s389
      %p398 = scmp.eq.s32.totalorder %s42, 0
      %p399 = por %p397, %p398
      %p400 = scmp.ne.s32.totalorder %s388, %s389
      %p401 = scmp.eq.s32.totalorder %s43, 1
      %p402 = por %p400, %p401
      %p404 = scmp.ne.s32.totalorder %s389, %s403
      %p405 = scmp.eq.s32.totalorder %s43, 0
      %p406 = por %p404, %p405
      %s408 = sadd.s32 %s407, 1
      %p411 = scmp.eq.s32.totalorder %s37, 1
      %p412 = scmp.ne.s32.totalorder %s407, %s409
      %p413 = scmp.eq.s32.totalorder %s37, 0
      %p414 = por %p412, %p413
      %p415 = scmp.ne.s32.totalorder %s407, %s409
      %p416 = scmp.eq.s32.totalorder %s42, 1
      %p417 = por %p415, %p416
      %p418 = scmp.ne.s32.totalorder %s409, %s410
      %p419 = scmp.eq.s32.totalorder %s42, 0
      %p420 = por %p418, %p419
      %p421 = scmp.ne.s32.totalorder %s409, %s410
      %p422 = scmp.eq.s32.totalorder %s43, 1
      %p423 = por %p421, %p422
      %p425 = scmp.ne.s32.totalorder %s410, %s424
      %p426 = scmp.eq.s32.totalorder %s43, 0
      %p427 = por %p425, %p426
      %s429 = sadd.s32 %s428, 1
      %p432 = scmp.eq.s32.totalorder %s37, 1
      %p433 = scmp.ne.s32.totalorder %s428, %s430
      %p434 = scmp.eq.s32.totalorder %s37, 0
      %p435 = por %p433, %p434
      %p436 = scmp.ne.s32.totalorder %s428, %s430
      %p437 = scmp.eq.s32.totalorder %s42, 1
      %p438 = por %p436, %p437
      %p439 = scmp.ne.s32.totalorder %s430, %s431
      %p440 = scmp.eq.s32.totalorder %s42, 0
      %p441 = por %p439, %p440
      %p442 = scmp.ne.s32.totalorder %s430, %s431
      %p443 = scmp.eq.s32.totalorder %s43, 1
      %p444 = por %p442, %p443
      %p446 = scmp.ne.s32.totalorder %s431, %s445
      %p447 = scmp.eq.s32.totalorder %s43, 0
      %p448 = por %p446, %p447
      %s449 = ssub.s32 %s37, %s44
      %p450 = scmp.eq.s32.totalorder %s449, 0
      %s452 = sadd.s32 %s451, 1
      %s453 = scalar_select %p450, %s451, %s452
      %p456 = pneg %p450
      %p457 = scmp.eq.s32.totalorder %s37, 1
      %p458 = por %p456, %p457
      %p459 = scmp.ne.s32.totalorder %s451, %s454
      %p460 = scmp.eq.s32.totalorder %s37, 0
      %p461 = por %p459, %p460
      %p462 = scmp.ne.s32.totalorder %s451, %s454
      %p463 = scmp.eq.s32.totalorder %s42, 1
      %p464 = por %p462, %p463
      %p465 = scmp.ne.s32.totalorder %s454, %s455
      %p466 = scmp.eq.s32.totalorder %s42, 0
      %p467 = por %p465, %p466
      %p468 = scmp.ne.s32.totalorder %s454, %s455
      %p469 = scmp.eq.s32.totalorder %s43, 1
      %p470 = por %p468, %p469
      %p472 = scmp.ne.s32.totalorder %s455, %s471
      %p473 = scmp.eq.s32.totalorder %s43, 0
      %p474 = por %p472, %p473
      %p475 = scmp.le.s32.totalorder 1, %s37
      %p476 = scmp.lt.s32.totalorder %s37, 3
      %p477 = pnand %p475, %p476
      %p478 = pneg %p477
      // Predicated region
      $region9: #{model_forward.1} parent=5 // pred_check
        _
      $region10: #{model_forward.1} parent=5 // pred_check_branch
        %480 = sbr.rel (%p477) target = $region12
      $region11: #{model_forward.1} parent=5 // pred_region
        %s481 = ssub.s32 %s37, 1
        // Predicated region
        $region13: #{model_forward.1} parent=11 // pred_check
          %p482 = pneg %p84
        $region14: #{model_forward.1} parent=11 // pred_check_branch
          %484 = sbr.rel (%p482) target = $region16
        $region15: #{model_forward.1} parent=11 // pred_region
          _
        $region16: #{model_forward.1} parent=11 // pred_fallthru
          _
        // Predicated region
        $region17: #{model_forward.1} parent=11 // pred_check
          %p485 = pneg %p105
        $region18: #{model_forward.1} parent=11 // pred_check_branch
          %487 = sbr.rel (%p485) target = $region20
        $region19: #{model_forward.1} parent=11 // pred_region
          _
        $region20: #{model_forward.1} parent=11 // pred_fallthru
          _
        // Predicated region
        $region21: #{model_forward.1} parent=11 // pred_check
          %p488 = pneg %p126
        $region22: #{model_forward.1} parent=11 // pred_check_branch
          %490 = sbr.rel (%p488) target = $region24
        $region23: #{model_forward.1} parent=11 // pred_region
          _
        $region24: #{model_forward.1} parent=11 // pred_fallthru
          _
        // Predicated region
        $region25: #{model_forward.1} parent=11 // pred_check
          %p491 = pneg %p147
        $region26: #{model_forward.1} parent=11 // pred_check_branch
          %493 = sbr.rel (%p491) target = $region28
        $region27: #{model_forward.1} parent=11 // pred_region
          _
        $region28: #{model_forward.1} parent=11 // pred_fallthru
          _
        // Predicated region
        $region29: #{model_forward.1} parent=11 // pred_check
          %p494 = pneg %p168
        $region30: #{model_forward.1} parent=11 // pred_check_branch
          %496 = sbr.rel (%p494) target = $region32
        $region31: #{model_forward.1} parent=11 // pred_region
          _
        $region32: #{model_forward.1} parent=11 // pred_fallthru
          _
        // Predicated region
        $region33: #{model_forward.1} parent=11 // pred_check
          %p497 = pneg %p189
        $region34: #{model_forward.1} parent=11 // pred_check_branch
          %499 = sbr.rel (%p497) target = $region36
        $region35: #{model_forward.1} parent=11 // pred_region
          _
        $region36: #{model_forward.1} parent=11 // pred_fallthru
          _
        // Predicated region
        $region37: #{model_forward.1} parent=11 // pred_check
          %p500 = pneg %p210
        $region38: #{model_forward.1} parent=11 // pred_check_branch
          %502 = sbr.rel (%p500) target = $region40
        $region39: #{model_forward.1} parent=11 // pred_region
          _
        $region40: #{model_forward.1} parent=11 // pred_fallthru
          _
        // Predicated region
        $region41: #{model_forward.1} parent=11 // pred_check
          %p503 = pneg %p231
        $region42: #{model_forward.1} parent=11 // pred_check_branch
          %505 = sbr.rel (%p503) target = $region44
        $region43: #{model_forward.1} parent=11 // pred_region
          _
        $region44: #{model_forward.1} parent=11 // pred_fallthru
          _
        // Predicated region
        $region45: #{model_forward.1} parent=11 // pred_check
          %p506 = pneg %p252
        $region46: #{model_forward.1} parent=11 // pred_check_branch
          %508 = sbr.rel (%p506) target = $region48
        $region47: #{model_forward.1} parent=11 // pred_region
          _
        $region48: #{model_forward.1} parent=11 // pred_fallthru
          _
        // Predicated region
        $region49: #{model_forward.1} parent=11 // pred_check
          %p509 = pneg %p273
        $region50: #{model_forward.1} parent=11 // pred_check_branch
          %511 = sbr.rel (%p509) target = $region52
        $region51: #{model_forward.1} parent=11 // pred_region
          _
        $region52: #{model_forward.1} parent=11 // pred_fallthru
          _
        // Predicated region
        $region53: #{model_forward.1} parent=11 // pred_check
          %p512 = pneg %p294
        $region54: #{model_forward.1} parent=11 // pred_check_branch
          %514 = sbr.rel (%p512) target = $region56
        $region55: #{model_forward.1} parent=11 // pred_region
          _
        $region56: #{model_forward.1} parent=11 // pred_fallthru
          _
        // Predicated region
        $region57: #{model_forward.1} parent=11 // pred_check
          %p515 = pneg %p315
        $region58: #{model_forward.1} parent=11 // pred_check_branch
          %517 = sbr.rel (%p515) target = $region60
        $region59: #{model_forward.1} parent=11 // pred_region
          _
        $region60: #{model_forward.1} parent=11 // pred_fallthru
          _
        // Predicated region
        $region61: #{model_forward.1} parent=11 // pred_check
          %p518 = pneg %p336
        $region62: #{model_forward.1} parent=11 // pred_check_branch
          %520 = sbr.rel (%p518) target = $region64
        $region63: #{model_forward.1} parent=11 // pred_region
          _
        $region64: #{model_forward.1} parent=11 // pred_fallthru
          _
        // Predicated region
        $region65: #{model_forward.1} parent=11 // pred_check
          %p521 = pneg %p357
        $region66: #{model_forward.1} parent=11 // pred_check_branch
          %523 = sbr.rel (%p521) target = $region68
        $region67: #{model_forward.1} parent=11 // pred_region
          _
        $region68: #{model_forward.1} parent=11 // pred_fallthru
          _
        // Predicated region
        $region69: #{model_forward.1} parent=11 // pred_check
          %p524 = pneg %p378
        $region70: #{model_forward.1} parent=11 // pred_check_branch
          %526 = sbr.rel (%p524) target = $region72
        $region71: #{model_forward.1} parent=11 // pred_region
          _
        $region72: #{model_forward.1} parent=11 // pred_fallthru
          _
        // Predicated region
        $region73: #{model_forward.1} parent=11 // pred_check
          %p527 = pneg %p399
        $region74: #{model_forward.1} parent=11 // pred_check_branch
          %529 = sbr.rel (%p527) target = $region76
        $region75: #{model_forward.1} parent=11 // pred_region
          _
        $region76: #{model_forward.1} parent=11 // pred_fallthru
          _
        // Predicated region
        $region77: #{model_forward.1} parent=11 // pred_check
          %p530 = pneg %p420
        $region78: #{model_forward.1} parent=11 // pred_check_branch
          %532 = sbr.rel (%p530) target = $region80
        $region79: #{model_forward.1} parent=11 // pred_region
          _
        $region80: #{model_forward.1} parent=11 // pred_fallthru
          _
        // Predicated region
        $region81: #{model_forward.1} parent=11 // pred_check
          %p533 = pneg %p441
        $region82: #{model_forward.1} parent=11 // pred_check_branch
          %535 = sbr.rel (%p533) target = $region84
        $region83: #{model_forward.1} parent=11 // pred_region
          _
        $region84: #{model_forward.1} parent=11 // pred_fallthru
          _
      $region12: #{model_forward.1} parent=5 // pred_fallthru
        _
      %p536 = scmp.lt.s32.totalorder %s37, 2
      // Predicated region
      $region85: #{model_forward.1} parent=5 // pred_check
        %p537 = pneg %p536
      $region86: #{model_forward.1} parent=5 // pred_check_branch
        %539 = sbr.rel (%p537) target = $region88
      $region87: #{model_forward.1} parent=5 // pred_region
        // Predicated region
        $region89: #{model_forward.1} parent=87 // pred_check
          %p540 = pneg %p57
        $region90: #{model_forward.1} parent=87 // pred_check_branch
          %542 = sbr.rel (%p540) target = $region92
        $region91: #{model_forward.1} parent=87 // pred_region
          %p543 = scmp.lt.s32.totalorder %s37, 1
          %s544 = scalar_select %p543, %s37, 1
          %s545 = smul.addr %s544, 8
          %s546 = scalar_lea.vmem %s1, %s545
        $region92: #{model_forward.1} parent=87 // pred_fallthru
          _
      $region88: #{model_forward.1} parent=5 // pred_fallthru
        _
      %p547 = scmp.le.s32.totalorder 1, %s37
      %p548 = scmp.lt.s32.totalorder %s37, 3
      %p549 = pnand %p547, %p548
      %p550 = pneg %p549
      // Predicated region
      $region93: #{model_forward.1} parent=5 // pred_check
        _
      $region94: #{model_forward.1} parent=5 // pred_check_branch
        %552 = sbr.rel (%p549) target = $region96
      $region95: #{model_forward.1} parent=5 // pred_region
        %s553 = ssub.s32 %s37, 1
        %p554 = scmp.lt.s32.totalorder %s42, 1
        %s555 = scalar_select %p554, %s42, 1
        %s556 = smul.addr %s555, 8
        %s557 = scalar_lea.vmem %s1, %s556
        %p558 = pneg %p63
        %p559 = pneg %p60
        %p560 = pneg %p84
        %p561 = pneg %p81
        %p562 = pneg %p105
        %p563 = pneg %p102
        %p564 = pneg %p126
        %p565 = pneg %p123
        %p566 = pneg %p147
        %p567 = pneg %p144
        %p568 = pneg %p168
        %p569 = pneg %p165
        %p570 = pneg %p189
        %p571 = pneg %p186
        %p572 = pneg %p210
        %p573 = pneg %p207
        %p574 = pneg %p231
        %p575 = pneg %p228
        %p576 = pneg %p252
        %p577 = pneg %p249
        %p578 = pneg %p273
        %p579 = pneg %p270
        %p580 = pneg %p294
        %p581 = pneg %p291
        %p582 = pneg %p315
        %p583 = pneg %p312
        %p584 = pneg %p336
        %p585 = pneg %p333
        %p586 = pneg %p357
        %p587 = pneg %p354
        %p588 = pneg %p378
        %p589 = pneg %p375
        %p590 = pneg %p399
        %p591 = pneg %p396
        %p592 = pneg %p420
        %p593 = pneg %p417
        %p594 = pneg %p441
        %p595 = pneg %p438
        %p596 = pneg %p467
        %p597 = pneg %p464
        %s598 = sand.u32 %s454, 1
        %s599 = scalar_lea.sflag [#allocation5], %s598
        %s600 = sand.u32 %s454, 1
        %s601 = scalar_lea.vmem [#allocation4], %s600
        %p602 = scmp.lt.s32.totalorder %s42, 1
        %s603 = scalar_select %p602, %s42, 1
        %s604 = smul.addr %s603, 8
        %s605 = scalar_lea.vmem %s1, %s604
        %v606 = vld [vmem:[%s605] sm:$0xff]
        %v607 = vld [vmem:[%s2] sm:$0x1]
        %v608 = vld [vmem:[%s3] sm:$0x1]
        %vm609 = vcmask 261120
        %v610 = vsel %vm609, %v606, 0.0
        %611 = vadd.xlane.f32.xlu0 %v610
        %v612 = vpop.xlane.xlu0 %611
        %v613 = vrcp.pop 32.0
        %v614 = vmul.f32 32.0, %v613
        %v615 = vsub.f32 1.0, %v614
        %v616 = vmul.f32 %v613, %v615
        %v617 = vadd.f32 %v613, %v616
        %vm618 = vweird.f32 %v613
        %v619 = vsel %vm618, %v613, %v617
        %v620 = vmul.f32 %v612, %v619
        %v621 = vsub.f32 %v606, %v620
        %v622 = vmul.f32 %v621, %v621
        %v623 = vsel %vm609, %v622, 0.0
        %624 = vadd.xlane.f32.xlu0 %v623
        %v625 = vpop.xlane.xlu0 %624
        %v626 = vmul.f32 %v625, %v619
        %v627 = vadd.f32 %v626, 1e-05
        %v628 = vrsqrt.pop %v627
        %v629 = vmul.f32 %v628, %v627
        %v630 = vmul.f32 %v629, %v628
        %v631 = vmul.f32 0.5, %v630
        %v632 = vsub.f32 1.5, %v631
        %v633 = vmul.f32 %v628, %v632
        %vm634 = vweird.f32 %v627
        %vm635 = vweird.f32 %v628
        %vm636 = vmor %vm634, %vm635
        %v637 = vsel %vm636, %v628, %v633
        %v638 = vmul.f32 %v621, %v637
        %v640 = vperm.slane %v607, 0
        %v642 = vmul.f32 %v638, %v640
        %v644 = vperm.slane %v608, 0
        %v646 = vadd.f32 %v642, %v644
        %s647 = sld [smem:[#allocation3 + %s42]]
        %v648 = vlaneseq
        %v649 = vand.u32 %v648, 127
        %v650 = vstv %s647
        %vm651 = vcmp.lt.s32.totalorder %v649, %v650
        %v652 = vsel %vm651, 0.0, -1e+09
        %v653 = vld [vmem:[%s4] sm:$0xff]
        %v654 = vld [vmem:[%s4 + $0x8] sm:$0xff]
        %v655 = vld [vmem:[%s4 + $0x10] sm:$0xff]
        %v656 = vld [vmem:[%s4 + $0x18] sm:$0xff]
        %v657 = vld [vmem:[%s5] sm:$0x1]
        %v659 = vperm.slane %v657, 0
        %v662 = vsel %vm609, %v646, 0
        %664 = vmatpush.msra.mxu0 0.0
        %665 = vmatpush.msra.mxu0 0.0
        %666 = vmatpush.msra.mxu0 0.0
        %667 = vmatpush.msra.mxu0 0.0
        %668 = vmatpush.msra.mxu0 0.0
        %669 = vmatpush.msra.mxu0 0.0
        %670 = vmatpush.msra.mxu0 0.0
        %671 = vmatpush.msra.mxu0 0.0
        %672 = vmatpush.msra.mxu0 0.0
        %673 = vmatpush.msra.mxu0 0.0
        %674 = vmatpush.msra.mxu0 0.0
        %675 = vmatpush.msra.mxu0 0.0
        %676 = vmatpush.msra.mxu0 %v656
        %677 = vmatpush.msra.mxu0 %v655
        %678 = vmatpush.msra.mxu0 %v654
        %679 = vmatpush.msra.mxu0 %v653
        %680 = vmatmul.f32.gmra.mxu0 %v662
        %v681 = vpop.f32.mrf.mxu0
        %v682 = vadd.f32 %v659, %v681
        %683 = vdwg.mxu0
        %685 = vrot.lane.b32.xlu0 %v682, 112
        %v686 = vpop.permute.xlu0 %685
        %687 = vrot.lane.b32.xlu0 %v682, 96
        %v688 = vpop.permute.xlu0 %687
        %vm689 = vcmask 130048
        %v690 = vsel %vm689, %v682, 0
        %v692 = vsel %vm689, %v688, 0
        %694 = vmatpush.xpose.msra.mxu0 0.0
        %695 = vmatpush.xpose.msra.mxu0 0.0
        %696 = vmatpush.xpose.msra.mxu0 0.0
        %697 = vmatpush.xpose.msra.mxu0 0.0
        %698 = vmatpush.xpose.msra.mxu0 0.0
        %699 = vmatpush.xpose.msra.mxu0 0.0
        %700 = vmatpush.xpose.msra.mxu0 0.0
        %701 = vmatpush.xpose.msra.mxu0 0.0
        %702 = vmatpush.xpose.msra.mxu0 0.0
        %703 = vmatpush.xpose.msra.mxu0 0.0
        %704 = vmatpush.xpose.msra.mxu0 0.0
        %705 = vmatpush.xpose.msra.mxu0 0.0
        %706 = vmatpush.xpose.msra.mxu0 0.0
        %707 = vmatpush.xpose.msra.mxu0 0.0
        %708 = vmatpush.xpose.msra.mxu0 0.0
        %709 = vmatpush.xpose.msra.mxu0 %v692
        %710 = vmatmul.f32.gmra.mxu0 %v690
        %v711 = vpop.f32.mrf.mxu0
        %v712 = vadd.f32 %v652, %v711
        %713 = vdwg.mxu0
        %714 = vrot.lane.b32.xlu0 %v686, 96
        %v715 = vpop.permute.xlu0 %714
        %v716 = vsel %vm689, %v686, 0
        %v718 = vsel %vm689, %v715, 0
        %720 = vmatpush.xpose.msra.mxu0 0.0
        %721 = vmatpush.xpose.msra.mxu0 0.0
        %722 = vmatpush.xpose.msra.mxu0 0.0
        %723 = vmatpush.xpose.msra.mxu0 0.0
        %724 = vmatpush.xpose.msra.mxu0 0.0
        %725 = vmatpush.xpose.msra.mxu0 0.0
        %726 = vmatpush.xpose.msra.mxu0 0.0
        %727 = vmatpush.xpose.msra.mxu0 0.0
        %728 = vmatpush.xpose.msra.mxu0 0.0
        %729 = vmatpush.xpose.msra.mxu0 0.0
        %730 = vmatpush.xpose.msra.mxu0 0.0
        %731 = vmatpush.xpose.msra.mxu0 0.0
        %732 = vmatpush.xpose.msra.mxu0 0.0
        %733 = vmatpush.xpose.msra.mxu0 0.0
        %734 = vmatpush.xpose.msra.mxu0 0.0
        %735 = vmatpush.xpose.msra.mxu0 %v718
        %736 = vmatmul.f32.gmra.mxu0 %v716
        %v737 = vpop.f32.mrf.mxu0
        %v738 = vadd.f32 %v652, %v737
        %739 = vdwg.mxu0
        %vm740 = vcmask 64512
        %v741 = vsel %vm740, %v712, -inf
        %742 = vmax.xlane.f32.xlu0 %v741
        %v743 = vpop.xlane.xlu0 %742
        %v744 = vsel %vm740, %v738, -inf
        %745 = vmax.xlane.f32.xlu0 %v744
        %v746 = vpop.xlane.xlu0 %745
        %v747 = vsub.f32 %v712, %v743
        %v748 = vsub.f32 %v738, %v746
        %v749 = vmul.f32 %v747, 1.442695
        %v750 = vpow.pop %v749
        %v751 = vmul.f32 %v748, 1.442695
        %v752 = vpow.pop %v751
        %v753 = vsel %vm740, %v750, 0.0
        %754 = vadd.xlane.f32.xlu0 %v753
        %v755 = vpop.xlane.xlu0 %754
        %v756 = vsel %vm740, %v752, 0.0
        %757 = vadd.xlane.f32.xlu0 %v756
        %v758 = vpop.xlane.xlu0 %757
        %v759 = vrcp.pop %v755
        %v760 = vrcp.pop %v758
        %v761 = vmul.f32 %v750, %v759
        %v762 = vmul.f32 %v752, %v760
        %763 = vrot.lane.b32.xlu0 %v682, 64
        %v764 = vpop.permute.xlu0 %763
        %v767 = vsel %vm740, %v761, 0
        %769 = vmatpush.msra.mxu0 0.0
        %770 = vmatpush.msra.mxu0 0.0
        %771 = vmatpush.msra.mxu0 0.0
        %772 = vmatpush.msra.mxu0 0.0
        %773 = vmatpush.msra.mxu0 0.0
        %774 = vmatpush.msra.mxu0 0.0
        %775 = vmatpush.msra.mxu0 0.0
        %776 = vmatpush.msra.mxu0 0.0
        %777 = vmatpush.msra.mxu0 0.0
        %778 = vmatpush.msra.mxu0 0.0
        %779 = vmatpush.msra.mxu0 0.0
        %780 = vmatpush.msra.mxu0 0.0
        %781 = vmatpush.msra.mxu0 0.0
        %782 = vmatpush.msra.mxu0 0.0
        %783 = vmatpush.msra.mxu0 0.0
        %784 = vmatpush.msra.mxu0 %v764
        %785 = vmatmul.f32.gmra.mxu0 %v767
        %v786 = vpop.f32.mrf.mxu0
        %v787 = vadd.f32 0.0, %v786
        %788 = vdwg.mxu0
        %789 = vrot.lane.b32.xlu0 %v686, 64
        %v790 = vpop.permute.xlu0 %789
        %v793 = vsel %vm740, %v762, 0
        %795 = vmatpush.msra.mxu0 0.0
        %796 = vmatpush.msra.mxu0 0.0
        %797 = vmatpush.msra.mxu0 0.0
        %798 = vmatpush.msra.mxu0 0.0
        %799 = vmatpush.msra.mxu0 0.0
        %800 = vmatpush.msra.mxu0 0.0
        %801 = vmatpush.msra.mxu0 0.0
        %802 = vmatpush.msra.mxu0 0.0
        %803 = vmatpush.msra.mxu0 0.0
        %804 = vmatpush.msra.mxu0 0.0
        %805 = vmatpush.msra.mxu0 0.0
        %806 = vmatpush.msra.mxu0 0.0
        %807 = vmatpush.msra.mxu0 0.0
        %808 = vmatpush.msra.mxu0 0.0
        %809 = vmatpush.msra.mxu0 0.0
        %810 = vmatpush.msra.mxu0 %v790
        %811 = vmatmul.f32.gmra.mxu0 %v793
        %v812 = vpop.f32.mrf.mxu0
        %v813 = vadd.f32 0.0, %v812
        %814 = vdwg.mxu0
        %v815 = vld [vmem:[%s6] sm:$0xff]
        %v816 = vld [vmem:[%s6 + $0x8] sm:$0xff]
        %v817 = vld [vmem:[%s6 + $0x10] sm:$0xff]
        %v818 = vld [vmem:[%s6 + $0x18] sm:$0xff]
        %v819 = vld [vmem:[%s7] sm:$0x1]
        %v821 = vsel %vm689, %v787, 0
        %823 = vmatpush.msra.mxu0 0.0
        %824 = vmatpush.msra.mxu0 0.0
        %825 = vmatpush.msra.mxu0 0.0
        %826 = vmatpush.msra.mxu0 0.0
        %827 = vmatpush.msra.mxu0 0.0
        %828 = vmatpush.msra.mxu0 0.0
        %829 = vmatpush.msra.mxu0 0.0
        %830 = vmatpush.msra.mxu0 0.0
        %831 = vmatpush.msra.mxu0 0.0
        %832 = vmatpush.msra.mxu0 0.0
        %833 = vmatpush.msra.mxu0 0.0
        %834 = vmatpush.msra.mxu0 0.0
        %835 = vmatpush.msra.mxu0 0.0
        %836 = vmatpush.msra.mxu0 0.0
        %837 = vmatpush.msra.mxu0 %v816
        %838 = vmatpush.msra.mxu0 %v815
        %839 = vmatmul.f32.gmra.mxu0 %v821
        %v840 = vpop.f32.mrf.mxu0
        %v841 = vadd.f32 0.0, %v840
        %842 = vdwg.mxu0
        %v844 = vperm.slane %v819, 0
        %v846 = vadd.f32 %v844, %v841
        %v848 = vsel %vm689, %v813, 0
        %850 = vmatpush.msra.mxu0 0.0
        %851 = vmatpush.msra.mxu0 0.0
        %852 = vmatpush.msra.mxu0 0.0
        %853 = vmatpush.msra.mxu0 0.0
        %854 = vmatpush.msra.mxu0 0.0
        %855 = vmatpush.msra.mxu0 0.0
        %856 = vmatpush.msra.mxu0 0.0
        %857 = vmatpush.msra.mxu0 0.0
        %858 = vmatpush.msra.mxu0 0.0
        %859 = vmatpush.msra.mxu0 0.0
        %860 = vmatpush.msra.mxu0 0.0
        %861 = vmatpush.msra.mxu0 0.0
        %862 = vmatpush.msra.mxu0 0.0
        %863 = vmatpush.msra.mxu0 0.0
        %864 = vmatpush.msra.mxu0 %v818
        %865 = vmatpush.msra.mxu0 %v817
        %866 = vmatmul.f32.gmra.mxu0 %v848
        %v867 = vpop.f32.mrf.mxu0
        %v868 = vadd.f32 0.0, %v867
        %869 = vdwg.mxu0
        %v870 = vadd.f32 %v846, %v868
        %v871 = vadd.f32 %v646, %v870
        %v872 = vld [vmem:[%s8] sm:$0x1]
        %v873 = vld [vmem:[%s9] sm:$0x1]
        %v874 = vsel %vm609, %v871, 0.0
        %875 = vadd.xlane.f32.xlu0 %v874
        %v876 = vpop.xlane.xlu0 %875
        %v877 = vmul.f32 %v876, %v619
        %v878 = vsub.f32 %v871, %v877
        %v879 = vmul.f32 %v878, %v878
        %v880 = vsel %vm609, %v879, 0.0
        %881 = vadd.xlane.f32.xlu0 %v880
        %v882 = vpop.xlane.xlu0 %881
        %v883 = vmul.f32 %v882, %v619
        %v884 = vadd.f32 %v883, 1e-05
        %v885 = vrsqrt.pop %v884
        %v886 = vmul.f32 %v885, %v884
        %v887 = vmul.f32 %v886, %v885
        %v888 = vmul.f32 0.5, %v887
        %v889 = vsub.f32 1.5, %v888
        %v890 = vmul.f32 %v885, %v889
        %vm891 = vweird.f32 %v884
        %vm892 = vweird.f32 %v885
        %vm893 = vmor %vm891, %vm892
        %v894 = vsel %vm893, %v885, %v890
        %v895 = vmul.f32 %v878, %v894
        %v897 = vperm.slane %v872, 0
        %v899 = vmul.f32 %v895, %v897
        %v901 = vperm.slane %v873, 0
        %v903 = vadd.f32 %v899, %v901
        %v904 = vld [vmem:[%s10] sm:$0xff]
        %v905 = vld [vmem:[%s10 + $0x8] sm:$0xff]
        %v906 = vld [vmem:[%s10 + $0x10] sm:$0xff]
        %v907 = vld [vmem:[%s10 + $0x18] sm:$0xff]
        %v908 = vld [vmem:[%s11] sm:$0x1]
        %v910 = vperm.slane %v908, 0
        %v913 = vsel %vm609, %v903, 0
        %915 = vmatpush.msra.mxu0 0.0
        %916 = vmatpush.msra.mxu0 0.0
        %917 = vmatpush.msra.mxu0 0.0
        %918 = vmatpush.msra.mxu0 0.0
        %919 = vmatpush.msra.mxu0 0.0
        %920 = vmatpush.msra.mxu0 0.0
        %921 = vmatpush.msra.mxu0 0.0
        %922 = vmatpush.msra.mxu0 0.0
        %923 = vmatpush.msra.mxu0 0.0
        %924 = vmatpush.msra.mxu0 0.0
        %925 = vmatpush.msra.mxu0 0.0
        %926 = vmatpush.msra.mxu0 0.0
        %927 = vmatpush.msra.mxu0 %v907
        %928 = vmatpush.msra.mxu0 %v906
        %929 = vmatpush.msra.mxu0 %v905
        %930 = vmatpush.msra.mxu0 %v904
        %931 = vmatmul.f32.gmra.mxu0 %v913
        %v932 = vpop.f32.mrf.mxu0
        %v933 = vadd.f32 %v910, %v932
        %934 = vdwg.mxu0
        %v935 = vmul.f32 %v933, %v933
        %v936 = vmul.f32 %v933, %v935
        %v937 = vmul.f32 %v936, 0.044715
        %v938 = vadd.f32 %v933, %v937
        %v939 = vmul.f32 %v938, 0.7978846
        %v940 = vtanh.pop %v939
        %v941 = vadd.f32 %v940, 1.0
        %v942 = vmul.f32 %v941, 0.5
        %v943 = vmul.f32 %v933, %v942
        %v944 = vld [vmem:[%s12] sm:$0xff]
        %v945 = vld [vmem:[%s12 + $0x8] sm:$0xff]
        %v946 = vld [vmem:[%s12 + $0x10] sm:$0xff]
        %v947 = vld [vmem:[%s12 + $0x18] sm:$0xff]
        %v948 = vld [vmem:[%s12 + $0x20] sm:$0xff]
        %v949 = vld [vmem:[%s12 + $0x28] sm:$0xff]
        %v950 = vld [vmem:[%s12 + $0x30] sm:$0xff]
        %v951 = vld [vmem:[%s12 + $0x38] sm:$0xff]
        %v952 = vld [vmem:[%s13] sm:$0x1]
        %v954 = vperm.slane %v952, 0
        %vm956 = vcmask 523264
        %v958 = vsel %vm956, %v943, 0
        %960 = vmatpush.msra.mxu0 0.0
        %961 = vmatpush.msra.mxu0 0.0
        %962 = vmatpush.msra.mxu0 0.0
        %963 = vmatpush.msra.mxu0 0.0
        %964 = vmatpush.msra.mxu0 0.0
        %965 = vmatpush.msra.mxu0 0.0
        %966 = vmatpush.msra.mxu0 0.0
        %967 = vmatpush.msra.mxu0 0.0
        %968 = vmatpush.msra.mxu0 %v951
        %969 = vmatpush.msra.mxu0 %v950
        %970 = vmatpush.msra.mxu0 %v949
        %971 = vmatpush.msra.mxu0 %v948
        %972 = vmatpush.msra.mxu0 %v947
        %973 = vmatpush.msra.mxu0 %v946
        %974 = vmatpush.msra.mxu0 %v945
        %975 = vmatpush.msra.mxu0 %v944
        %976 = vmatmul.f32.gmra.mxu0 %v958
        %v977 = vpop.f32.mrf.mxu0
        %v978 = vadd.f32 %v954, %v977
        %979 = vdwg.mxu0
        %v980 = vadd.f32 %v903, %v978
        %v981 = vld [vmem:[%s14] sm:$0x1]
        %v982 = vld [vmem:[%s15] sm:$0x1]
        %v983 = vsel %vm609, %v980, 0.0
        %984 = vadd.xlane.f32.xlu0 %v983
        %v985 = vpop.xlane.xlu0 %984
        %v986 = vmul.f32 %v985, %v619
        %v987 = vsub.f32 %v980, %v986
        %v988 = vmul.f32 %v987, %v987
        %v989 = vsel %vm609, %v988, 0.0
        %990 = vadd.xlane.f32.xlu0 %v989
        %v991 = vpop.xlane.xlu0 %990
        %v992 = vmul.f32 %v991, %v619
        %v993 = vadd.f32 %v992, 1e-05
        %v994 = vrsqrt.pop %v993
        %v995 = vmul.f32 %v994, %v993
        %v996 = vmul.f32 %v995, %v994
        %v997 = vmul.f32 0.5, %v996
        %v998 = vsub.f32 1.5, %v997
        %v999 = vmul.f32 %v994, %v998
        %vm1000 = vweird.f32 %v993
        %vm1001 = vweird.f32 %v994
        %vm1002 = vmor %vm1000, %vm1001
        %v1003 = vsel %vm1002, %v994, %v999
        %v1004 = vmul.f32 %v987, %v1003
        %v1006 = vperm.slane %v981, 0
        %v1008 = vmul.f32 %v1004, %v1006
        %v1010 = vperm.slane %v982, 0
        %v1012 = vadd.f32 %v1008, %v1010
        %s1013 = scalar_lea.vmem %s4, 32
        %v1014 = vld [vmem:[%s1013] sm:$0xff]
        %v1015 = vld [vmem:[%s1013 + $0x8] sm:$0xff]
        %v1016 = vld [vmem:[%s1013 + $0x10] sm:$0xff]
        %v1017 = vld [vmem:[%s1013 + $0x18] sm:$0xff]
        %s1018 = scalar_lea.vmem %s5, 1
        %v1019 = vld [vmem:[%s1018] sm:$0x1]
        %v1021 = vperm.slane %v1019, 0
        %v1024 = vsel %vm609, %v1012, 0
        %1026 = vmatpush.msra.mxu0 0.0
        %1027 = vmatpush.msra.mxu0 0.0
        %1028 = vmatpush.msra.mxu0 0.0
        %1029 = vmatpush.msra.mxu0 0.0
        %1030 = vmatpush.msra.mxu0 0.0
        %1031 = vmatpush.msra.mxu0 0.0
        %1032 = vmatpush.msra.mxu0 0.0
        %1033 = vmatpush.msra.mxu0 0.0
        %1034 = vmatpush.msra.mxu0 0.0
        %1035 = vmatpush.msra.mxu0 0.0
        %1036 = vmatpush.msra.mxu0 0.0
        %1037 = vmatpush.msra.mxu0 0.0
        %1038 = vmatpush.msra.mxu0 %v1017
        %1039 = vmatpush.msra.mxu0 %v1016
        %1040 = vmatpush.msra.mxu0 %v1015
        %1041 = vmatpush.msra.mxu0 %v1014
        %1042 = vmatmul.f32.gmra.mxu0 %v1024
        %v1043 = vpop.f32.mrf.mxu0
        %v1044 = vadd.f32 %v1021, %v1043
        %1045 = vdwg.mxu0
        %1047 = vrot.lane.b32.xlu0 %v1044, 112
        %v1048 = vpop.permute.xlu0 %1047
        %1049 = vrot.lane.b32.xlu0 %v1044, 96
        %v1050 = vpop.permute.xlu0 %1049
        %v1051 = vsel %vm689, %v1044, 0
        %v1053 = vsel %vm689, %v1050, 0
        %1055 = vmatpush.xpose.msra.mxu0 0.0
        %1056 = vmatpush.xpose.msra.mxu0 0.0
        %1057 = vmatpush.xpose.msra.mxu0 0.0
        %1058 = vmatpush.xpose.msra.mxu0 0.0
        %1059 = vmatpush.xpose.msra.mxu0 0.0
        %1060 = vmatpush.xpose.msra.mxu0 0.0
        %1061 = vmatpush.xpose.msra.mxu0 0.0
        %1062 = vmatpush.xpose.msra.mxu0 0.0
        %1063 = vmatpush.xpose.msra.mxu0 0.0
        %1064 = vmatpush.xpose.msra.mxu0 0.0
        %1065 = vmatpush.xpose.msra.mxu0 0.0
        %1066 = vmatpush.xpose.msra.mxu0 0.0
        %1067 = vmatpush.xpose.msra.mxu0 0.0
        %1068 = vmatpush.xpose.msra.mxu0 0.0
        %1069 = vmatpush.xpose.msra.mxu0 0.0
        %1070 = vmatpush.xpose.msra.mxu0 %v1053
        %1071 = vmatmul.f32.gmra.mxu0 %v1051
        %v1072 = vpop.f32.mrf.mxu0
        %v1073 = vadd.f32 %v652, %v1072
        %1074 = vdwg.mxu0
        %1075 = vrot.lane.b32.xlu0 %v1048, 96
        %v1076 = vpop.permute.xlu0 %1075
        %v1077 = vsel %vm689, %v1048, 0
        %v1079 = vsel %vm689, %v1076, 0
        %1081 = vmatpush.xpose.msra.mxu0 0.0
        %1082 = vmatpush.xpose.msra.mxu0 0.0
        %1083 = vmatpush.xpose.msra.mxu0 0.0
        %1084 = vmatpush.xpose.msra.mxu0 0.0
        %1085 = vmatpush.xpose.msra.mxu0 0.0
        %1086 = vmatpush.xpose.msra.mxu0 0.0
        %1087 = vmatpush.xpose.msra.mxu0 0.0
        %1088 = vmatpush.xpose.msra.mxu0 0.0
        %1089 = vmatpush.xpose.msra.mxu0 0.0
        %1090 = vmatpush.xpose.msra.mxu0 0.0
        %1091 = vmatpush.xpose.msra.mxu0 0.0
        %1092 = vmatpush.xpose.msra.mxu0 0.0
        %1093 = vmatpush.xpose.msra.mxu0 0.0
        %1094 = vmatpush.xpose.msra.mxu0 0.0
        %1095 = vmatpush.xpose.msra.mxu0 0.0
        %1096 = vmatpush.xpose.msra.mxu0 %v1079
        %1097 = vmatmul.f32.gmra.mxu0 %v1077
        %v1098 = vpop.f32.mrf.mxu0
        %v1099 = vadd.f32 %v652, %v1098
        %1100 = vdwg.mxu0
        %v1101 = vsel %vm740, %v1073, -inf
        %1102 = vmax.xlane.f32.xlu0 %v1101
        %v1103 = vpop.xlane.xlu0 %1102
        %v1104 = vsel %vm740, %v1099, -inf
        %1105 = vmax.xlane.f32.xlu0 %v1104
        %v1106 = vpop.xlane.xlu0 %1105
        %v1107 = vsub.f32 %v1073, %v1103
        %v1108 = vsub.f32 %v1099, %v1106
        %v1109 = vmul.f32 %v1107, 1.442695
        %v1110 = vpow.pop %v1109
        %v1111 = vmul.f32 %v1108, 1.442695
        %v1112 = vpow.pop %v1111
        %v1113 = vsel %vm740, %v1110, 0.0
        %1114 = vadd.xlane.f32.xlu0 %v1113
        %v1115 = vpop.xlane.xlu0 %1114
        %v1116 = vsel %vm740, %v1112, 0.0
        %1117 = vadd.xlane.f32.xlu0 %v1116
        %v1118 = vpop.xlane.xlu0 %1117
        %v1119 = vrcp.pop %v1115
        %v1120 = vrcp.pop %v1118
        %v1121 = vmul.f32 %v1110, %v1119
        %v1122 = vmul.f32 %v1112, %v1120
        %1123 = vrot.lane.b32.xlu0 %v1044, 64
        %v1124 = vpop.permute.xlu0 %1123
        %v1127 = vsel %vm740, %v1121, 0
        %1129 = vmatpush.msra.mxu0 0.0
        %1130 = vmatpush.msra.mxu0 0.0
        %1131 = vmatpush.msra.mxu0 0.0
        %1132 = vmatpush.msra.mxu0 0.0
        %1133 = vmatpush.msra.mxu0 0.0
        %1134 = vmatpush.msra.mxu0 0.0
        %1135 = vmatpush.msra.mxu0 0.0
        %1136 = vmatpush.msra.mxu0 0.0
        %1137 = vmatpush.msra.mxu0 0.0
        %1138 = vmatpush.msra.mxu0 0.0
        %1139 = vmatpush.msra.mxu0 0.0
        %1140 = vmatpush.msra.mxu0 0.0
        %1141 = vmatpush.msra.mxu0 0.0
        %1142 = vmatpush.msra.mxu0 0.0
        %1143 = vmatpush.msra.mxu0 0.0
        %1144 = vmatpush.msra.mxu0 %v1124
        %1145 = vmatmul.f32.gmra.mxu0 %v1127
        %v1146 = vpop.f32.mrf.mxu0
        %v1147 = vadd.f32 0.0, %v1146
        %1148 = vdwg.mxu0
        %1149 = vrot.lane.b32.xlu0 %v1048, 64
        %v1150 = vpop.permute.xlu0 %1149
        %v1153 = vsel %vm740, %v1122, 0
        %1155 = vmatpush.msra.mxu0 0.0
        %1156 = vmatpush.msra.mxu0 0.0
        %1157 = vmatpush.msra.mxu0 0.0
        %1158 = vmatpush.msra.mxu0 0.0
        %1159 = vmatpush.msra.mxu0 0.0
        %1160 = vmatpush.msra.mxu0 0.0
        %1161 = vmatpush.msra.mxu0 0.0
        %1162 = vmatpush.msra.mxu0 0.0
        %1163 = vmatpush.msra.mxu0 0.0
        %1164 = vmatpush.msra.mxu0 0.0
        %1165 = vmatpush.msra.mxu0 0.0
        %1166 = vmatpush.msra.mxu0 0.0
        %1167 = vmatpush.msra.mxu0 0.0
        %1168 = vmatpush.msra.mxu0 0.0
        %1169 = vmatpush.msra.mxu0 0.0
        %1170 = vmatpush.msra.mxu0 %v1150
        %1171 = vmatmul.f32.gmra.mxu0 %v1153
        %v1172 = vpop.f32.mrf.mxu0
        %v1173 = vadd.f32 0.0, %v1172
        %1174 = vdwg.mxu0
        %s1175 = scalar_lea.vmem %s6, 32
        %v1176 = vld [vmem:[%s1175] sm:$0xff]
        %v1177 = vld [vmem:[%s1175 + $0x8] sm:$0xff]
        %v1178 = vld [vmem:[%s1175 + $0x10] sm:$0xff]
        %v1179 = vld [vmem:[%s1175 + $0x18] sm:$0xff]
        %s1180 = scalar_lea.vmem %s7, 1
        %v1181 = vld [vmem:[%s1180] sm:$0x1]
        %v1183 = vsel %vm689, %v1147, 0
        %1185 = vmatpush.msra.mxu0 0.0
        %1186 = vmatpush.msra.mxu0 0.0
        %1187 = vmatpush.msra.mxu0 0.0
        %1188 = vmatpush.msra.mxu0 0.0
        %1189 = vmatpush.msra.mxu0 0.0
        %1190 = vmatpush.msra.mxu0 0.0
        %1191 = vmatpush.msra.mxu0 0.0
        %1192 = vmatpush.msra.mxu0 0.0
        %1193 = vmatpush.msra.mxu0 0.0
        %1194 = vmatpush.msra.mxu0 0.0
        %1195 = vmatpush.msra.mxu0 0.0
        %1196 = vmatpush.msra.mxu0 0.0
        %1197 = vmatpush.msra.mxu0 0.0
        %1198 = vmatpush.msra.mxu0 0.0
        %1199 = vmatpush.msra.mxu0 %v1177
        %1200 = vmatpush.msra.mxu0 %v1176
        %1201 = vmatmul.f32.gmra.mxu0 %v1183
        %v1202 = vpop.f32.mrf.mxu0
        %v1203 = vadd.f32 0.0, %v1202
        %1204 = vdwg.mxu0
        %v1206 = vperm.slane %v1181, 0
        %v1208 = vadd.f32 %v1206, %v1203
        %v1210 = vsel %vm689, %v1173, 0
        %1212 = vmatpush.msra.mxu0 0.0
        %1213 = vmatpush.msra.mxu0 0.0
        %1214 = vmatpush.msra.mxu0 0.0
        %1215 = vmatpush.msra.mxu0 0.0
        %1216 = vmatpush.msra.mxu0 0.0
        %1217 = vmatpush.msra.mxu0 0.0
        %1218 = vmatpush.msra.mxu0 0.0
        %1219 = vmatpush.msra.mxu0 0.0
        %1220 = vmatpush.msra.mxu0 0.0
        %1221 = vmatpush.msra.mxu0 0.0
        %1222 = vmatpush.msra.mxu0 0.0
        %1223 = vmatpush.msra.mxu0 0.0
        %1224 = vmatpush.msra.mxu0 0.0
        %1225 = vmatpush.msra.mxu0 0.0
        %1226 = vmatpush.msra.mxu0 %v1179
        %1227 = vmatpush.msra.mxu0 %v1178
        %1228 = vmatmul.f32.gmra.mxu0 %v1210
        %v1229 = vpop.f32.mrf.mxu0
        %v1230 = vadd.f32 0.0, %v1229
        %1231 = vdwg.mxu0
        %v1232 = vadd.f32 %v1208, %v1230
        %v1233 = vadd.f32 %v1012, %v1232
        %s1234 = scalar_lea.vmem %s8, 1
        %v1235 = vld [vmem:[%s1234] sm:$0x1]
        %s1236 = scalar_lea.vmem %s9, 1
        %v1237 = vld [vmem:[%s1236] sm:$0x1]
        %v1238 = vsel %vm609, %v1233, 0.0
        %1239 = vadd.xlane.f32.xlu0 %v1238
        %v1240 = vpop.xlane.xlu0 %1239
        %v1241 = vmul.f32 %v1240, %v619
        %v1242 = vsub.f32 %v1233, %v1241
        %v1243 = vmul.f32 %v1242, %v1242
        %v1244 = vsel %vm609, %v1243, 0.0
        %1245 = vadd.xlane.f32.xlu0 %v1244
        %v1246 = vpop.xlane.xlu0 %1245
        %v1247 = vmul.f32 %v1246, %v619
        %v1248 = vadd.f32 %v1247, 1e-05
        %v1249 = vrsqrt.pop %v1248
        %v1250 = vmul.f32 %v1249, %v1248
        %v1251 = vmul.f32 %v1250, %v1249
        %v1252 = vmul.f32 0.5, %v1251
        %v1253 = vsub.f32 1.5, %v1252
        %v1254 = vmul.f32 %v1249, %v1253
        %vm1255 = vweird.f32 %v1248
        %vm1256 = vweird.f32 %v1249
        %vm1257 = vmor %vm1255, %vm1256
        %v1258 = vsel %vm1257, %v1249, %v1254
        %v1259 = vmul.f32 %v1242, %v1258
        %v1261 = vperm.slane %v1235, 0
        %v1263 = vmul.f32 %v1259, %v1261
        %v1265 = vperm.slane %v1237, 0
        %v1267 = vadd.f32 %v1263, %v1265
        %s1268 = scalar_lea.vmem %s10, 32
        %v1269 = vld [vmem:[%s1268] sm:$0xff]
        %v1270 = vld [vmem:[%s1268 + $0x8] sm:$0xff]
        %v1271 = vld [vmem:[%s1268 + $0x10] sm:$0xff]
        %v1272 = vld [vmem:[%s1268 + $0x18] sm:$0xff]
        %s1273 = scalar_lea.vmem %s11, 1
        %v1274 = vld [vmem:[%s1273] sm:$0x1]
        %v1276 = vperm.slane %v1274, 0
        %v1279 = vsel %vm609, %v1267, 0
        %1281 = vmatpush.msra.mxu0 0.0
        %1282 = vmatpush.msra.mxu0 0.0
        %1283 = vmatpush.msra.mxu0 0.0
        %1284 = vmatpush.msra.mxu0 0.0
        %1285 = vmatpush.msra.mxu0 0.0
        %1286 = vmatpush.msra.mxu0 0.0
        %1287 = vmatpush.msra.mxu0 0.0
        %1288 = vmatpush.msra.mxu0 0.0
        %1289 = vmatpush.msra.mxu0 0.0
        %1290 = vmatpush.msra.mxu0 0.0
        %1291 = vmatpush.msra.mxu0 0.0
        %1292 = vmatpush.msra.mxu0 0.0
        %1293 = vmatpush.msra.mxu0 %v1272
        %1294 = vmatpush.msra.mxu0 %v1271
        %1295 = vmatpush.msra.mxu0 %v1270
        %1296 = vmatpush.msra.mxu0 %v1269
        %1297 = vmatmul.f32.gmra.mxu0 %v1279
        %v1298 = vpop.f32.mrf.mxu0
        %v1299 = vadd.f32 %v1276, %v1298
        %1300 = vdwg.mxu0
        %v1301 = vmul.f32 %v1299, %v1299
        %v1302 = vmul.f32 %v1299, %v1301
        %v1303 = vmul.f32 %v1302, 0.044715
        %v1304 = vadd.f32 %v1299, %v1303
        %v1305 = vmul.f32 %v1304, 0.7978846
        %v1306 = vtanh.pop %v1305
        %v1307 = vadd.f32 %v1306, 1.0
        %v1308 = vmul.f32 %v1307, 0.5
        %v1309 = vmul.f32 %v1299, %v1308
        %s1310 = scalar_lea.vmem %s12, 64
        %v1311 = vld [vmem:[%s1310] sm:$0xff]
        %v1312 = vld [vmem:[%s1310 + $0x8] sm:$0xff]
        %v1313 = vld [vmem:[%s1310 + $0x10] sm:$0xff]
        %v1314 = vld [vmem:[%s1310 + $0x18] sm:$0xff]
        %v1315 = vld [vmem:[%s1310 + $0x20] sm:$0xff]
        %v1316 = vld [vmem:[%s1310 + $0x28] sm:$0xff]
        %v1317 = vld [vmem:[%s1310 + $0x30] sm:$0xff]
        %v1318 = vld [vmem:[%s1310 + $0x38] sm:$0xff]
        %s1319 = scalar_lea.vmem %s13, 1
        %v1320 = vld [vmem:[%s1319] sm:$0x1]
        %v1322 = vperm.slane %v1320, 0
        %v1325 = vsel %vm956, %v1309, 0
        %1327 = vmatpush.msra.mxu0 0.0
        %1328 = vmatpush.msra.mxu0 0.0
        %1329 = vmatpush.msra.mxu0 0.0
        %1330 = vmatpush.msra.mxu0 0.0
        %1331 = vmatpush.msra.mxu0 0.0
        %1332 = vmatpush.msra.mxu0 0.0
        %1333 = vmatpush.msra.mxu0 0.0
        %1334 = vmatpush.msra.mxu0 0.0
        %1335 = vmatpush.msra.mxu0 %v1318
        %1336 = vmatpush.msra.mxu0 %v1317
        %1337 = vmatpush.msra.mxu0 %v1316
        %1338 = vmatpush.msra.mxu0 %v1315
        %1339 = vmatpush.msra.mxu0 %v1314
        %1340 = vmatpush.msra.mxu0 %v1313
        %1341 = vmatpush.msra.mxu0 %v1312
        %1342 = vmatpush.msra.mxu0 %v1311
        %1343 = vmatmul.f32.gmra.mxu0 %v1325
        %v1344 = vpop.f32.mrf.mxu0
        %v1345 = vadd.f32 %v1322, %v1344
        %1346 = vdwg.mxu0
        %v1347 = vadd.f32 %v1267, %v1345
        %s1348 = scalar_lea.vmem %s14, 1
        %v1349 = vld [vmem:[%s1348] sm:$0x1]
        %s1350 = scalar_lea.vmem %s15, 1
        %v1351 = vld [vmem:[%s1350] sm:$0x1]
        %v1352 = vsel %vm609, %v1347, 0.0
        %1353 = vadd.xlane.f32.xlu0 %v1352
        %v1354 = vpop.xlane.xlu0 %1353
        %v1355 = vmul.f32 %v1354, %v619
        %v1356 = vsub.f32 %v1347, %v1355
        %v1357 = vmul.f32 %v1356, %v1356
        %v1358 = vsel %vm609, %v1357, 0.0
        %1359 = vadd.xlane.f32.xlu0 %v1358
        %v1360 = vpop.xlane.xlu0 %1359
        %v1361 = vmul.f32 %v1360, %v619
        %v1362 = vadd.f32 %v1361, 1e-05
        %v1363 = vrsqrt.pop %v1362
        %v1364 = vmul.f32 %v1363, %v1362
        %v1365 = vmul.f32 %v1364, %v1363
        %v1366 = vmul.f32 0.5, %v1365
        %v1367 = vsub.f32 1.5, %v1366
        %v1368 = vmul.f32 %v1363, %v1367
        %vm1369 = vweird.f32 %v1362
        %vm1370 = vweird.f32 %v1363
        %vm1371 = vmor %vm1369, %vm1370
        %v1372 = vsel %vm1371, %v1363, %v1368
        %v1373 = vmul.f32 %v1356, %v1372
        %v1375 = vperm.slane %v1349, 0
        %v1377 = vmul.f32 %v1373, %v1375
        %v1379 = vperm.slane %v1351, 0
        %v1381 = vadd.f32 %v1377, %v1379
        %v1382 = vld [vmem:[%s16] sm:$0xff]
        %v1383 = vld [vmem:[%s16 + $0x8] sm:$0xff]
        %v1384 = vld [vmem:[%s16 + $0x10] sm:$0xff]
        %v1385 = vld [vmem:[%s16 + $0x18] sm:$0xff]
        %v1386 = vld [vmem:[%s17] sm:$0x1]
        %v1388 = vsel %vm609, %v1381, 0
        %1390 = vmatpush.msra.mxu0 0.0
        %1391 = vmatpush.msra.mxu0 0.0
        %1392 = vmatpush.msra.mxu0 0.0
        %1393 = vmatpush.msra.mxu0 0.0
        %1394 = vmatpush.msra.mxu0 0.0
        %1395 = vmatpush.msra.mxu0 0.0
        %1396 = vmatpush.msra.mxu0 0.0
        %1397 = vmatpush.msra.mxu0 0.0
        %1398 = vmatpush.msra.mxu0 0.0
        %1399 = vmatpush.msra.mxu0 0.0
        %1400 = vmatpush.msra.mxu0 0.0
        %1401 = vmatpush.msra.mxu0 0.0
        %1402 = vmatpush.msra.mxu0 %v1385
        %1403 = vmatpush.msra.mxu0 %v1384
        %1404 = vmatpush.msra.mxu0 %v1383
        %1405 = vmatpush.msra.mxu0 %v1382
        %1406 = vmatmul.f32.gmra.mxu0 %v1388
        %v1407 = vpop.f32.mrf.mxu0
        %v1408 = vadd.f32 %v1386, %v1407
        %1409 = vdwg.mxu0
        %v1410 = vtanh.pop %v1408
        %v1411 = vld [vmem:[%s18] sm:$0xff]
        %v1412 = vld [vmem:[%s18 + $0x8] sm:$0xff]
        %v1413 = vld [vmem:[%s18 + $0x10] sm:$0xff]
        %v1414 = vld [vmem:[%s18 + $0x18] sm:$0xff]
        %v1415 = vld [vmem:[%s19] sm:$0x1]
        %v1417 = vsel %vm609, %v1410, 0
        %1419 = vmatpush.msra.mxu0 0.0
        %1420 = vmatpush.msra.mxu0 0.0
        %1421 = vmatpush.msra.mxu0 0.0
        %1422 = vmatpush.msra.mxu0 0.0
        %1423 = vmatpush.msra.mxu0 0.0
        %1424 = vmatpush.msra.mxu0 0.0
        %1425 = vmatpush.msra.mxu0 0.0
        %1426 = vmatpush.msra.mxu0 0.0
        %1427 = vmatpush.msra.mxu0 0.0
        %1428 = vmatpush.msra.mxu0 0.0
        %1429 = vmatpush.msra.mxu0 0.0
        %1430 = vmatpush.msra.mxu0 0.0
        %1431 = vmatpush.msra.mxu0 %v1414
        %1432 = vmatpush.msra.mxu0 %v1413
        %1433 = vmatpush.msra.mxu0 %v1412
        %1434 = vmatpush.msra.mxu0 %v1411
        %1435 = vmatmul.f32.gmra.mxu0 %v1417
        %v1436 = vpop.f32.mrf.mxu0
        %v1437 = vadd.f32 %v1415, %v1436
        %1438 = vdwg.mxu0
        %1439 = vst [vmem:[%s601] sm:$0x1] %v1437
        %s1440 = sand.u32 %s454, 1
        %s1441 = scalar_lea.sflag [#allocation5], %s1440
        %s1442 = sand.u32 %s454, 1
        %s1443 = scalar_lea.vmem [#allocation4], %s1442
        // Predicated region
        $region97: #{model_forward.1} parent=95 // pred_check
          %p1444 = pneg %p464
        $region98: #{model_forward.1} parent=95 // pred_check_branch
          %1446 = sbr.rel (%p1444) target = $region100
        $region99: #{model_forward.1} parent=95 // pred_region
          %1448 = vsyncadd %s1441, 0
          %s1449 = scalar_lea.hbm %s20, %s42
          %s1451 = sshll.u32 %s1443, 4
          %s1452 = int_to_ptr.vmem [resolvable:$true] %s1451
          %s1453 = sshll.u32 %s1449, 4
          %s1454 = int_to_ptr.hbm [resolvable:$true] %s1453
          %1456 = dma.vmem_to_hbm [thread:$0]  %s1452, 16, %s1454, %s1441
        $region100: #{model_forward.1} parent=95 // pred_fallthru
          _
      $region96: #{model_forward.1} parent=5 // pred_fallthru
        _
      %p1457 = scmp.le.s32.totalorder 2, %s37
      // Predicated region
      $region101: #{model_forward.1} parent=5 // pred_check
        %p1458 = pneg %p1457
      $region102: #{model_forward.1} parent=5 // pred_check_branch
        %1460 = sbr.rel (%p1458) target = $region104
      $region103: #{model_forward.1} parent=5 // pred_region
        %s1461 = ssub.s32 %s37, 2
        // Predicated region
        $region105: #{model_forward.1} parent=103 // pred_check
          %p1462 = pneg %p470
        $region106: #{model_forward.1} parent=103 // pred_check_branch
          %1464 = sbr.rel (%p1462) target = $region108
        $region107: #{model_forward.1} parent=103 // pred_region
          %s1465 = sand.u32 %s455, 1
          %s1466 = scalar_lea.sflag [#allocation5], %s1465
          %s1467 = sand.u32 %s455, 1
          %s1468 = scalar_lea.vmem [#allocation4], %s1467
          %1470 = dma.done %s1466, 16
        $region108: #{model_forward.1} parent=103 // pred_fallthru
          _
      $region104: #{model_forward.1} parent=5 // pred_fallthru
        _
    $region6: #{model_forward.1} parent=1 // loop_footer
      %s41 = sadd.s32 1, %s37
    $region7: #{model_forward.1} parent=1 // loop_footer_branch
      %36 = sbr.rel target = $region3
    $region8: #{model_forward.1} parent=1 // loop_exit
      _
    %1471 = vsyncpa [#allocation5], 1
    %s1472 = scalar_lea.sflag [#allocation5], 1
    %1473 = vsyncpa %s1472, 1

</llo_original>
